<compile_context>
chip_gen: v6e
topology: v6e:2x2x1
jax: 0.10.0
libtpu: 0.0.40
codegen_flags: <defaults>
</compile_context>

<pallas_src>
import functools

import jax
import jax.numpy as jnp
from jax.experimental import pallas as pl
from jax.experimental.pallas import tpu as pltpu


# ----------------------------------------------------------------------------
# Pallas kernel: whole GCN forward for TB graphs per grid step, as 3 GEMMs.
# ----------------------------------------------------------------------------
def _gcn_kron_kernel(x_ref, k1_ref, b1_ref, k2_ref, b2_ref, w3_ref, b3_ref,
                     out_ref):
    # x_ref:  (TB, N*F)  bf16   -- native flat SHAP layout
    # k1_ref: (N*F, N*H) bf16   -- kron(A_hat^T, W1)
    # k2_ref: (N*H, N*H) bf16   -- kron(A_hat^T, W2)
    # w3_ref: (N*H, C_pad) bf16 -- mean-pool folded + lane-padded classifier
    # biases f32; out_ref (TB, C_pad) f32 (lane-dense store)

    x = x_ref[...]

    # Layer 1:  relu(x_flat @ K1 + b1_tiled)      == relu(A_hat @ X @ W1 + b1)
    h1 = jnp.dot(x, k1_ref[...], preferred_element_type=jnp.float32)
    h1 = jnp.maximum(h1 + b1_ref[...], 0.0)                       # (TB, N*H) f32

    # Layer 2:  relu(h1 @ K2 + b2_tiled)          == relu(A_hat @ H1 @ W2 + b2)
    h2 = jnp.dot(h1.astype(jnp.bfloat16), k2_ref[...],
                 preferred_element_type=jnp.float32)
    h2 = jnp.maximum(h2 + b2_ref[...], 0.0)                       # (TB, N*H) f32

    # Mean-pool over nodes + classifier, folded into one GEMM:
    #   mean_n(H2) @ W3 + b3  ==  h2_flat @ (tile(W3, (N,1))/N) + b3
    logits = jnp.dot(h2.astype(jnp.bfloat16), w3_ref[...],
                     preferred_element_type=jnp.float32) + b3_ref[...]
    out_ref[...] = logits.astype(out_ref.dtype)                   # (TB, C_pad)


# ----------------------------------------------------------------------------
# Wrapper that mirrors GNNWrapper._explain_forward
# ----------------------------------------------------------------------------
@functools.partial(jax.jit, static_argnames=("num_nodes", "num_feats"))
def gnn_wrapper_explain_forward(x_flat_list, adj_norm, params,
                                *, num_nodes, num_feats):
    """x_flat_list: (B, N*F) flattened node features (SHAP perturbations).
    Each row corresponds to original_data.x.reshape(-1); all rows share the
    original graph's edge_index (dense normalized adjacency adj_norm)."""
    B = x_flat_list.shape[0]
    N, F = num_nodes, num_feats

    w1, b1, w2, b2, w3, b3 = params
    H = w1.shape[1]
    C = w3.shape[1]
    NF, NH = N * F, N * H

    # --- Kronecker-folded layer weights (shared adjacency across the batch) --
    K1 = jnp.kron(adj_norm.T, w1)                    # (N*F, N*H)
    K2 = jnp.kron(adj_norm.T, w2)                    # (N*H, N*H)
    b1_t = jnp.tile(b1.reshape(1, H), (1, N))        # (1, N*H)
    b2_t = jnp.tile(b2.reshape(1, H), (1, N))        # (1, N*H)
    W3p = jnp.tile(w3, (N, 1)) / N                   # (N*H, C)  mean-pool folded

    # Lane-dense classifier output: pad C -> 128 lanes (sliced off below).
    C_pad = 128
    W3p = jnp.pad(W3p, ((0, 0), (0, C_pad - C)))
    b3_p = jnp.pad(b3.reshape(1, C), ((0, 0), (0, C_pad - C)))

    # bf16 MXU operands; biases / accumulation stay f32.
    xb = x_flat_list.astype(jnp.bfloat16)            # native flat (B, N*F)
    K1b = K1.astype(jnp.bfloat16)
    K2b = K2.astype(jnp.bfloat16)
    W3b = W3p.astype(jnp.bfloat16)

    # Grid: 2 "parallel" steps so v7x's two TensorCores each get one (on
    # v5e/v6e the extra step vs grid=1 costs ~0.35 us).  TB kept a multiple of
    # 8 so the (TB, *) blocks satisfy the sublane constraint.
    num_steps = 2 if B >= 16 else 1
    TB = pl.cdiv(pl.cdiv(B, num_steps), 8) * 8
    B_pad = num_steps * TB
    if B_pad != B:
        xb = jnp.pad(xb, ((0, B_pad - B), (0, 0)))

    # Advisory cost hint (Kronecker math).
    flops = 2 * B_pad * (NF * NH + NH * NH + NH * C_pad)
    bytes_accessed = (B_pad * NF * 2                 # x (bf16)
                      + B_pad * C_pad * 4            # logits (f32)
                      + (NF * NH + NH * NH + NH * C_pad) * 2   # K1, K2, W3'
                      + (2 * NH + C_pad) * 4)        # biases (f32)

    out = pl.pallas_call(
        _gcn_kron_kernel,
        out_shape=jax.ShapeDtypeStruct((B_pad, C_pad), jnp.float32),
        grid_spec=pltpu.PrefetchScalarGridSpec(
            num_scalar_prefetch=0,
            grid=(num_steps,),
            in_specs=[
                pl.BlockSpec((TB, NF), lambda b: (b, 0)),       # x (per step)
                pl.BlockSpec((NF, NH), lambda b: (0, 0)),       # K1 (invariant)
                pl.BlockSpec((1, NH), lambda b: (0, 0)),        # b1 tiled
                pl.BlockSpec((NH, NH), lambda b: (0, 0)),       # K2 (invariant)
                pl.BlockSpec((1, NH), lambda b: (0, 0)),        # b2 tiled
                pl.BlockSpec((NH, C_pad), lambda b: (0, 0)),    # W3' (invariant)
                pl.BlockSpec((1, C_pad), lambda b: (0, 0)),     # b3 padded
            ],
            out_specs=pl.BlockSpec((TB, C_pad), lambda b: (b, 0)),
        ),
        compiler_params=pltpu.CompilerParams(
            dimension_semantics=("parallel",),
            vmem_limit_bytes=32 << 20),
        cost_estimate=pl.CostEstimate(flops=flops, transcendentals=0,
                                      bytes_accessed=bytes_accessed),
    )(xb, K1b, b1_t, K2b, b2_t, W3b, b3_p)

    return out[:B, :C]


# ----------------------------------------------------------------------------
# Glue: deterministic graph + parameter construction (plain JAX)
# ----------------------------------------------------------------------------
def build_normalized_adjacency(edge_index, num_nodes):
    """A_hat = D^{-1/2} (A + I) D^{-1/2}, dense, symmetric-normalized (GCN)."""
    src, dst = edge_index
    A = jnp.zeros((num_nodes, num_nodes), jnp.float32)
    A = A.at[src, dst].set(1.0)
    A = A.at[dst, src].set(1.0)                      # undirected
    A = A + jnp.eye(num_nodes, dtype=jnp.float32)    # self loops
    deg = jnp.sum(A, axis=1)
    d_inv_sqrt = 1.0 / jnp.sqrt(deg)
    return A * d_inv_sqrt[:, None] * d_inv_sqrt[None, :]


def init_gcn_params(key, num_feats, hidden, num_classes):
    k1, k2, k3 = jax.random.split(key, 3)
    w1 = jax.random.normal(k1, (num_feats, hidden), jnp.float32) * 0.1
    b1 = jnp.zeros((1, hidden), jnp.float32)
    w2 = jax.random.normal(k2, (hidden, hidden), jnp.float32) * 0.1
    b2 = jnp.zeros((1, hidden), jnp.float32)
    w3 = jax.random.normal(k3, (hidden, num_classes), jnp.float32) * 0.1
    b3 = jnp.zeros((1, num_classes), jnp.float32)
    return (w1, b1, w2, b2, w3, b3)


def reference_forward_kron(x_flat_list, adj_norm, params, num_nodes, num_feats):
    """Pure-JAX reference with the SAME Kronecker fold + bf16 operand / f32
    accumulation strategy as the kernel (tight tolerance check)."""
    w1, b1, w2, b2, w3, b3 = params
    N, H, C = num_nodes, w1.shape[1], w3.shape[1]
    K1 = jnp.kron(adj_norm.T, w1).astype(jnp.bfloat16)
    K2 = jnp.kron(adj_norm.T, w2).astype(jnp.bfloat16)
    W3p = (jnp.tile(w3, (N, 1)) / N).astype(jnp.bfloat16)
    b1_t = jnp.tile(b1.reshape(1, H), (1, N))
    b2_t = jnp.tile(b2.reshape(1, H), (1, N))
    x = x_flat_list.astype(jnp.bfloat16)
    h1 = jnp.maximum(
        jnp.dot(x, K1, preferred_element_type=jnp.float32) + b1_t, 0.0)
    h2 = jnp.maximum(
        jnp.dot(h1.astype(jnp.bfloat16), K2,
                preferred_element_type=jnp.float32) + b2_t, 0.0)
    return jnp.dot(h2.astype(jnp.bfloat16), W3p,
                   preferred_element_type=jnp.float32) + b3.reshape(1, C)


def reference_forward_f32(x_flat_list, adj_norm, params, num_nodes, num_feats):
    """Full-precision per-layer GCN (the module's semantic spec)."""
    w1, b1, w2, b2, w3, b3 = params
    B = x_flat_list.shape[0]
    x = x_flat_list.reshape(B, num_nodes, num_feats)
    h1 = jnp.maximum(jnp.einsum("ij,bjf,fh->bih", adj_norm, x, w1) + b1, 0.0)
    h2 = jnp.maximum(jnp.einsum("ij,bjh,hk->bik", adj_norm, h1, w2) + b2, 0.0)
    pooled = h2.mean(axis=1)
    return pooled @ w3 + b3


if __name__ == "__main__":
    # Shapes consistent with the wrapper's semantics: original_data.x is
    # (N, F); SHAP hands us B flattened perturbations of shape (B, N*F).
    B, N, F, H, C = 256, 16, 8, 32, 4

    key = jax.random.PRNGKey(0)
    k_feat, k_param = jax.random.split(key)

    # Fixed graph topology (ring), mimicking original_data.edge_index.
    src = jnp.arange(N, dtype=jnp.int32)
    dst = (src + 1) % N
    edge_index = jnp.stack([src, dst], axis=0)        # (2, E)
    adj_norm = build_normalized_adjacency(edge_index, N)

    params = init_gcn_params(k_param, F, H, C)

    # SHAP-style input: list of flattened node-feature vectors, shape (B, N*F).
    x_flat_list = jax.random.normal(k_feat, (B, N * F), jnp.float32)

    out = gnn_wrapper_explain_forward(
        x_flat_list, adj_norm, params, num_nodes=N, num_feats=F)
    out = jax.block_until_ready(out)

    ref_kron = reference_forward_kron(x_flat_list, adj_norm, params, N, F)
    ref_f32 = reference_forward_f32(x_flat_list, adj_norm, params, N, F)

    assert out.shape == (B, C)
    assert jnp.allclose(out, ref_kron, atol=2e-2, rtol=2e-2), \
        "mismatch vs same-precision reference"
    assert jnp.allclose(out, ref_f32, atol=5e-2, rtol=5e-2), \
        "mismatch vs f32 semantic reference"

    print("KERNEL_OK")
</pallas_src>

<mosaic_0001>
module attributes {stable_mosaic.version = 11 : i64} {
  func.func @_gcn_kron_kernel(%arg0: i32, %arg1: memref<128x128xbf16, #tpu.memory_space<vmem>>, %arg2: memref<128x512xbf16, #tpu.memory_space<vmem>>, %arg3: memref<1x512xf32, #tpu.memory_space<vmem>>, %arg4: memref<512x512xbf16, #tpu.memory_space<vmem>>, %arg5: memref<1x512xf32, #tpu.memory_space<vmem>>, %arg6: memref<512x128xbf16, #tpu.memory_space<vmem>>, %arg7: memref<1x128xf32, #tpu.memory_space<vmem>>, %arg8: memref<128x128xf32, #tpu.memory_space<vmem>>) attributes {dimension_semantics = [#tpu.dimension_semantics<parallel>], iteration_bounds = array<i64: 2>, scalar_prefetch = 0 : i64, scratch_operands = 0 : i64, tpu.core_type = #tpu.core_type<tc>, window_params = [{transform_indices = @transform_0, window_bounds = array<i64: 128, 128>}, {pipeline_mode = #tpu.pipeline_mode<synchronous>, transform_indices = @transform_1, window_bounds = array<i64: 128, 512>}, {pipeline_mode = #tpu.pipeline_mode<synchronous>, transform_indices = @transform_2, window_bounds = array<i64: 1, 512>}, {pipeline_mode = #tpu.pipeline_mode<synchronous>, transform_indices = @transform_3, window_bounds = array<i64: 512, 512>}, {pipeline_mode = #tpu.pipeline_mode<synchronous>, transform_indices = @transform_4, window_bounds = array<i64: 1, 512>}, {pipeline_mode = #tpu.pipeline_mode<synchronous>, transform_indices = @transform_5, window_bounds = array<i64: 512, 128>}, {pipeline_mode = #tpu.pipeline_mode<synchronous>, transform_indices = @transform_6, window_bounds = array<i64: 1, 128>}, {transform_indices = @transform_7, window_bounds = array<i64: 128, 128>}]} {
    %c0 = arith.constant 0 : index
    %c0_0 = arith.constant 0 : index
    %0 = vector.load %arg1[%c0, %c0_0] : memref<128x128xbf16, #tpu.memory_space<vmem>>, vector<128x128xbf16>
    %c0_1 = arith.constant 0 : index
    %c0_2 = arith.constant 0 : index
    %1 = vector.load %arg2[%c0_1, %c0_2] : memref<128x512xbf16, #tpu.memory_space<vmem>>, vector<128x512xbf16>
    %cst = arith.constant dense<0.000000e+00> : vector<128x512xf32>
    %2 = tpu.matmul %0, %1, %cst {dimension_numbers = #tpu.dot_dimension_numbers<[1], [0], [0], [1], [0, 0, 1, 1], [], []>} : vector<128x128xbf16>, vector<128x512xbf16>, vector<128x512xf32> -> vector<128x512xf32>
    %c0_3 = arith.constant 0 : index
    %c0_4 = arith.constant 0 : index
    %3 = vector.load %arg3[%c0_3, %c0_4] : memref<1x512xf32, #tpu.memory_space<vmem>>, vector<1x512xf32>
    %4 = vector.broadcast %3 : vector<1x512xf32> to vector<128x512xf32>
    %5 = arith.addf %2, %4 : vector<128x512xf32>
    %cst_5 = arith.constant 0.000000e+00 : f32
    %6 = vector.broadcast %cst_5 : f32 to vector<128x512xf32>
    %7 = arith.maximumf %5, %6 : vector<128x512xf32>
    %8 = arith.truncf %7 : vector<128x512xf32> to vector<128x512xbf16>
    %c0_6 = arith.constant 0 : index
    %c0_7 = arith.constant 0 : index
    %9 = vector.load %arg4[%c0_6, %c0_7] : memref<512x512xbf16, #tpu.memory_space<vmem>>, vector<512x512xbf16>
    %cst_8 = arith.constant dense<0.000000e+00> : vector<128x512xf32>
    %10 = tpu.matmul %8, %9, %cst_8 {dimension_numbers = #tpu.dot_dimension_numbers<[1], [0], [0], [1], [0, 0, 1, 1], [], []>} : vector<128x512xbf16>, vector<512x512xbf16>, vector<128x512xf32> -> vector<128x512xf32>
    %c0_9 = arith.constant 0 : index
    %c0_10 = arith.constant 0 : index
    %11 = vector.load %arg5[%c0_9, %c0_10] : memref<1x512xf32, #tpu.memory_space<vmem>>, vector<1x512xf32>
    %12 = vector.broadcast %11 : vector<1x512xf32> to vector<128x512xf32>
    %13 = arith.addf %10, %12 : vector<128x512xf32>
    %cst_11 = arith.constant 0.000000e+00 : f32
    %14 = vector.broadcast %cst_11 : f32 to vector<128x512xf32>
    %15 = arith.maximumf %13, %14 : vector<128x512xf32>
    %16 = arith.truncf %15 : vector<128x512xf32> to vector<128x512xbf16>
    %c0_12 = arith.constant 0 : index
    %c0_13 = arith.constant 0 : index
    %17 = vector.load %arg6[%c0_12, %c0_13] : memref<512x128xbf16, #tpu.memory_space<vmem>>, vector<512x128xbf16>
    %cst_14 = arith.constant dense<0.000000e+00> : vector<128x128xf32>
    %18 = tpu.matmul %16, %17, %cst_14 {dimension_numbers = #tpu.dot_dimension_numbers<[1], [0], [0], [1], [0, 0, 1, 1], [], []>} : vector<128x512xbf16>, vector<512x128xbf16>, vector<128x128xf32> -> vector<128x128xf32>
    %c0_15 = arith.constant 0 : index
    %c0_16 = arith.constant 0 : index
    %19 = vector.load %arg7[%c0_15, %c0_16] : memref<1x128xf32, #tpu.memory_space<vmem>>, vector<1x128xf32>
    %20 = vector.broadcast %19 : vector<1x128xf32> to vector<128x128xf32>
    %21 = arith.addf %18, %20 : vector<128x128xf32>
    %c0_17 = arith.constant 0 : index
    %c0_18 = arith.constant 0 : index
    %22 = vector.load %arg8[%c0_17, %c0_18] : memref<128x128xf32, #tpu.memory_space<vmem>>, vector<128x128xf32>
    tpu.vector_store %arg8[%c0_17, %c0_18], %21 {strides = array<i32>} : memref<128x128xf32, #tpu.memory_space<vmem>>, vector<128x128xf32>,
    return
  }
  func.func @transform_0(%arg0: i32) -> (i32, i32) {
    %c0_i32 = arith.constant 0 : i32
    %c0_i32_0 = arith.constant 0 : i32
    return %arg0, %c0_i32 : i32, i32
  }
  func.func @transform_1(%arg0: i32) -> (i32, i32) {
    %c0_i32 = arith.constant 0 : i32
    %c0_i32_0 = arith.constant 0 : i32
    %c0_i32_1 = arith.constant 0 : i32
    return %c0_i32, %c0_i32_0 : i32, i32
  }
  func.func @transform_2(%arg0: i32) -> (i32, i32) {
    %c0_i32 = arith.constant 0 : i32
    %c0_i32_0 = arith.constant 0 : i32
    %c0_i32_1 = arith.constant 0 : i32
    return %c0_i32, %c0_i32_0 : i32, i32
  }
  func.func @transform_3(%arg0: i32) -> (i32, i32) {
    %c0_i32 = arith.constant 0 : i32
    %c0_i32_0 = arith.constant 0 : i32
    %c0_i32_1 = arith.constant 0 : i32
    return %c0_i32, %c0_i32_0 : i32, i32
  }
  func.func @transform_4(%arg0: i32) -> (i32, i32) {
    %c0_i32 = arith.constant 0 : i32
    %c0_i32_0 = arith.constant 0 : i32
    %c0_i32_1 = arith.constant 0 : i32
    return %c0_i32, %c0_i32_0 : i32, i32
  }
  func.func @transform_5(%arg0: i32) -> (i32, i32) {
    %c0_i32 = arith.constant 0 : i32
    %c0_i32_0 = arith.constant 0 : i32
    %c0_i32_1 = arith.constant 0 : i32
    return %c0_i32, %c0_i32_0 : i32, i32
  }
  func.func @transform_6(%arg0: i32) -> (i32, i32) {
    %c0_i32 = arith.constant 0 : i32
    %c0_i32_0 = arith.constant 0 : i32
    %c0_i32_1 = arith.constant 0 : i32
    return %c0_i32, %c0_i32_0 : i32, i32
  }
  func.func @transform_7(%arg0: i32) -> (i32, i32) {
    %c0_i32 = arith.constant 0 : i32
    %c0_i32_0 = arith.constant 0 : i32
    return %arg0, %c0_i32 : i32, i32
  }
}

</mosaic_0001>

<llo_original>
// kernel: gnn_wrapper_explain_forward.1
$region0: #{gnn_wrapper_explain_forward.1}
  #allocation0 [shape = 'u32[]', space=smem, size = 0x4, offset = 0x4, fixed_abs, tag = 'smem constant byte address 0x4 - core index']
  #allocation1 [shape = 'u32[144,128]{1,0:T(1,128)}', space=vmem, size = 0x12000, scoped, tag = 'internal scratch']
  %s0 = inlined_call_operand.vmem [shape: bf16[256,128], index: 0, kind: input, shape index: {}]
  %s1 = inlined_call_operand.vmem [shape: bf16[128,512], index: 1, kind: input, shape index: {}]
  %s2 = inlined_call_operand.vmem [shape: f32[1,512], index: 2, kind: input, shape index: {}]
  %s3 = inlined_call_operand.vmem [shape: bf16[512,512], index: 3, kind: input, shape index: {}]
  %s4 = inlined_call_operand.vmem [shape: f32[1,512], index: 4, kind: input, shape index: {}]
  %s5 = inlined_call_operand.vmem [shape: bf16[512,128], index: 5, kind: input, shape index: {}]
  %s6 = inlined_call_operand.vmem [shape: f32[1,128], index: 6, kind: input, shape index: {}]
  %s7 = inlined_call_operand.vmem [shape: f32[256,128], index: 7, kind: output, shape index: {}]
  %s8 = sld [smem:[#allocation0]]
  $region61: #{gnn_wrapper_explain_forward.1} parent=0
    _
  %s10 = ssub.s32 1, %s8
  %s11 = scalar_select 0, %s10, %s8
  loop: start=0, step=1, limit=4
  $region2: #{gnn_wrapper_explain_forward.1} parent=0 // loop_pre_header
    _
  $region3: #{gnn_wrapper_explain_forward.1} parent=0 // loop_header
    %s13 = sphi 0, %s17
    %p14 = scmp.ge.s32.totalorder %s13, 4
    %s23 = sphi 0, %s25
    %s26 = sphi 0, %s23
    %s27 = sphi 0, %s26
    %s43 = sphi 0, %s27
    %s47 = sphi 0, %s47
    %s49 = sphi 0, %s47
    %s50 = sphi 0, %s49
    %s64 = sphi 0, %s50
    %s68 = sphi 0, %s68
    %s70 = sphi 0, %s68
    %s71 = sphi 0, %s70
    %s85 = sphi 0, %s71
    %s89 = sphi 0, %s89
    %s91 = sphi 0, %s89
    %s92 = sphi 0, %s91
    %s106 = sphi 0, %s92
    %s110 = sphi 0, %s110
    %s112 = sphi 0, %s110
    %s113 = sphi 0, %s112
    %s127 = sphi 0, %s113
    %s131 = sphi 0, %s131
    %s133 = sphi 0, %s131
    %s134 = sphi 0, %s133
    %s148 = sphi 0, %s134
    %s152 = sphi 0, %s152
    %s154 = sphi 0, %s152
    %s155 = sphi 0, %s154
    %s169 = sphi 0, %s155
    %s175 = sphi 0, %s177
    %s178 = sphi 0, %s175
    %s179 = sphi 0, %s178
    %s195 = sphi 0, %s179
  $region4: #{gnn_wrapper_explain_forward.1} parent=0 // loop_header_branch
    %16 = sbr.rel (%p14) target = $region8
  $region5: #{gnn_wrapper_explain_forward.1} parent=0 // loop_body
    %s18 = ssub.s32 %s13, 1
    %s19 = ssub.s32 %s13, 2
    %s20 = sadd.s32 %s13, 1
    %s21 = ssub.s32 %s13, %s20
    %p22 = scmp.eq.s32.totalorder %s21, 0
    %s24 = sadd.s32 %s23, 1
    %s25 = scalar_select %p22, %s23, %s24
    %p28 = pneg %p22
    %p29 = scmp.eq.s32.totalorder %s13, 1
    %p30 = por %p28, %p29
    %p31 = scmp.ne.s32.totalorder %s23, %s26
    %p32 = scmp.eq.s32.totalorder %s13, 0
    %p33 = por %p31, %p32
    %p34 = scmp.ne.s32.totalorder %s23, %s26
    %p35 = scmp.eq.s32.totalorder %s18, 1
    %p36 = por %p34, %p35
    %p37 = scmp.ne.s32.totalorder %s26, %s27
    %p38 = scmp.eq.s32.totalorder %s18, 0
    %p39 = por %p37, %p38
    %p40 = scmp.ne.s32.totalorder %s26, %s27
    %p41 = scmp.eq.s32.totalorder %s19, 1
    %p42 = por %p40, %p41
    %p44 = scmp.ne.s32.totalorder %s27, %s43
    %p45 = scmp.eq.s32.totalorder %s19, 0
    %p46 = por %p44, %p45
    %s48 = sadd.s32 %s47, 1
    %p51 = scmp.eq.s32.totalorder %s13, 1
    %p52 = scmp.ne.s32.totalorder %s47, %s49
    %p53 = scmp.eq.s32.totalorder %s13, 0
    %p54 = por %p52, %p53
    %p55 = scmp.ne.s32.totalorder %s47, %s49
    %p56 = scmp.eq.s32.totalorder %s18, 1
    %p57 = por %p55, %p56
    %p58 = scmp.ne.s32.totalorder %s49, %s50
    %p59 = scmp.eq.s32.totalorder %s18, 0
    %p60 = por %p58, %p59
    %p61 = scmp.ne.s32.totalorder %s49, %s50
    %p62 = scmp.eq.s32.totalorder %s19, 1
    %p63 = por %p61, %p62
    %p65 = scmp.ne.s32.totalorder %s50, %s64
    %p66 = scmp.eq.s32.totalorder %s19, 0
    %p67 = por %p65, %p66
    %s69 = sadd.s32 %s68, 1
    %p72 = scmp.eq.s32.totalorder %s13, 1
    %p73 = scmp.ne.s32.totalorder %s68, %s70
    %p74 = scmp.eq.s32.totalorder %s13, 0
    %p75 = por %p73, %p74
    %p76 = scmp.ne.s32.totalorder %s68, %s70
    %p77 = scmp.eq.s32.totalorder %s18, 1
    %p78 = por %p76, %p77
    %p79 = scmp.ne.s32.totalorder %s70, %s71
    %p80 = scmp.eq.s32.totalorder %s18, 0
    %p81 = por %p79, %p80
    %p82 = scmp.ne.s32.totalorder %s70, %s71
    %p83 = scmp.eq.s32.totalorder %s19, 1
    %p84 = por %p82, %p83
    %p86 = scmp.ne.s32.totalorder %s71, %s85
    %p87 = scmp.eq.s32.totalorder %s19, 0
    %p88 = por %p86, %p87
    %s90 = sadd.s32 %s89, 1
    %p93 = scmp.eq.s32.totalorder %s13, 1
    %p94 = scmp.ne.s32.totalorder %s89, %s91
    %p95 = scmp.eq.s32.totalorder %s13, 0
    %p96 = por %p94, %p95
    %p97 = scmp.ne.s32.totalorder %s89, %s91
    %p98 = scmp.eq.s32.totalorder %s18, 1
    %p99 = por %p97, %p98
    %p100 = scmp.ne.s32.totalorder %s91, %s92
    %p101 = scmp.eq.s32.totalorder %s18, 0
    %p102 = por %p100, %p101
    %p103 = scmp.ne.s32.totalorder %s91, %s92
    %p104 = scmp.eq.s32.totalorder %s19, 1
    %p105 = por %p103, %p104
    %p107 = scmp.ne.s32.totalorder %s92, %s106
    %p108 = scmp.eq.s32.totalorder %s19, 0
    %p109 = por %p107, %p108
    %s111 = sadd.s32 %s110, 1
    %p114 = scmp.eq.s32.totalorder %s13, 1
    %p115 = scmp.ne.s32.totalorder %s110, %s112
    %p116 = scmp.eq.s32.totalorder %s13, 0
    %p117 = por %p115, %p116
    %p118 = scmp.ne.s32.totalorder %s110, %s112
    %p119 = scmp.eq.s32.totalorder %s18, 1
    %p120 = por %p118, %p119
    %p121 = scmp.ne.s32.totalorder %s112, %s113
    %p122 = scmp.eq.s32.totalorder %s18, 0
    %p123 = por %p121, %p122
    %p124 = scmp.ne.s32.totalorder %s112, %s113
    %p125 = scmp.eq.s32.totalorder %s19, 1
    %p126 = por %p124, %p125
    %p128 = scmp.ne.s32.totalorder %s113, %s127
    %p129 = scmp.eq.s32.totalorder %s19, 0
    %p130 = por %p128, %p129
    %s132 = sadd.s32 %s131, 1
    %p135 = scmp.eq.s32.totalorder %s13, 1
    %p136 = scmp.ne.s32.totalorder %s131, %s133
    %p137 = scmp.eq.s32.totalorder %s13, 0
    %p138 = por %p136, %p137
    %p139 = scmp.ne.s32.totalorder %s131, %s133
    %p140 = scmp.eq.s32.totalorder %s18, 1
    %p141 = por %p139, %p140
    %p142 = scmp.ne.s32.totalorder %s133, %s134
    %p143 = scmp.eq.s32.totalorder %s18, 0
    %p144 = por %p142, %p143
    %p145 = scmp.ne.s32.totalorder %s133, %s134
    %p146 = scmp.eq.s32.totalorder %s19, 1
    %p147 = por %p145, %p146
    %p149 = scmp.ne.s32.totalorder %s134, %s148
    %p150 = scmp.eq.s32.totalorder %s19, 0
    %p151 = por %p149, %p150
    %s153 = sadd.s32 %s152, 1
    %p156 = scmp.eq.s32.totalorder %s13, 1
    %p157 = scmp.ne.s32.totalorder %s152, %s154
    %p158 = scmp.eq.s32.totalorder %s13, 0
    %p159 = por %p157, %p158
    %p160 = scmp.ne.s32.totalorder %s152, %s154
    %p161 = scmp.eq.s32.totalorder %s18, 1
    %p162 = por %p160, %p161
    %p163 = scmp.ne.s32.totalorder %s154, %s155
    %p164 = scmp.eq.s32.totalorder %s18, 0
    %p165 = por %p163, %p164
    %p166 = scmp.ne.s32.totalorder %s154, %s155
    %p167 = scmp.eq.s32.totalorder %s19, 1
    %p168 = por %p166, %p167
    %p170 = scmp.ne.s32.totalorder %s155, %s169
    %p171 = scmp.eq.s32.totalorder %s19, 0
    %p172 = por %p170, %p171
    %s173 = ssub.s32 %s13, %s20
    %p174 = scmp.eq.s32.totalorder %s173, 0
    %s176 = sadd.s32 %s175, 1
    %s177 = scalar_select %p174, %s175, %s176
    %p180 = pneg %p174
    %p181 = scmp.eq.s32.totalorder %s13, 1
    %p182 = por %p180, %p181
    %p183 = scmp.ne.s32.totalorder %s175, %s178
    %p184 = scmp.eq.s32.totalorder %s13, 0
    %p185 = por %p183, %p184
    %p186 = scmp.ne.s32.totalorder %s175, %s178
    %p187 = scmp.eq.s32.totalorder %s18, 1
    %p188 = por %p186, %p187
    %p189 = scmp.ne.s32.totalorder %s178, %s179
    %p190 = scmp.eq.s32.totalorder %s18, 0
    %p191 = por %p189, %p190
    %p192 = scmp.ne.s32.totalorder %s178, %s179
    %p193 = scmp.eq.s32.totalorder %s19, 1
    %p194 = por %p192, %p193
    %p196 = scmp.ne.s32.totalorder %s179, %s195
    %p197 = scmp.eq.s32.totalorder %s19, 0
    %p198 = por %p196, %p197
    %p199 = scmp.le.s32.totalorder 1, %s13
    %p200 = scmp.lt.s32.totalorder %s13, 3
    %p201 = pnand %p199, %p200
    %p202 = pneg %p201
    // Predicated region
    $region9: #{gnn_wrapper_explain_forward.1} parent=5 // pred_check
      _
    $region10: #{gnn_wrapper_explain_forward.1} parent=5 // pred_check_branch
      %204 = sbr.rel (%p201) target = $region12
    $region11: #{gnn_wrapper_explain_forward.1} parent=5 // pred_region
      %s205 = ssub.s32 %s13, 1
      // Predicated region
      $region13: #{gnn_wrapper_explain_forward.1} parent=11 // pred_check
        %p206 = pneg %p60
      $region14: #{gnn_wrapper_explain_forward.1} parent=11 // pred_check_branch
        %208 = sbr.rel (%p206) target = $region16
      $region15: #{gnn_wrapper_explain_forward.1} parent=11 // pred_region
        _
      $region16: #{gnn_wrapper_explain_forward.1} parent=11 // pred_fallthru
        _
      // Predicated region
      $region17: #{gnn_wrapper_explain_forward.1} parent=11 // pred_check
        %p209 = pneg %p81
      $region18: #{gnn_wrapper_explain_forward.1} parent=11 // pred_check_branch
        %211 = sbr.rel (%p209) target = $region20
      $region19: #{gnn_wrapper_explain_forward.1} parent=11 // pred_region
        _
      $region20: #{gnn_wrapper_explain_forward.1} parent=11 // pred_fallthru
        _
      // Predicated region
      $region21: #{gnn_wrapper_explain_forward.1} parent=11 // pred_check
        %p212 = pneg %p102
      $region22: #{gnn_wrapper_explain_forward.1} parent=11 // pred_check_branch
        %214 = sbr.rel (%p212) target = $region24
      $region23: #{gnn_wrapper_explain_forward.1} parent=11 // pred_region
        _
      $region24: #{gnn_wrapper_explain_forward.1} parent=11 // pred_fallthru
        _
      // Predicated region
      $region25: #{gnn_wrapper_explain_forward.1} parent=11 // pred_check
        %p215 = pneg %p123
      $region26: #{gnn_wrapper_explain_forward.1} parent=11 // pred_check_branch
        %217 = sbr.rel (%p215) target = $region28
      $region27: #{gnn_wrapper_explain_forward.1} parent=11 // pred_region
        _
      $region28: #{gnn_wrapper_explain_forward.1} parent=11 // pred_fallthru
        _
      // Predicated region
      $region29: #{gnn_wrapper_explain_forward.1} parent=11 // pred_check
        %p218 = pneg %p144
      $region30: #{gnn_wrapper_explain_forward.1} parent=11 // pred_check_branch
        %220 = sbr.rel (%p218) target = $region32
      $region31: #{gnn_wrapper_explain_forward.1} parent=11 // pred_region
        _
      $region32: #{gnn_wrapper_explain_forward.1} parent=11 // pred_fallthru
        _
      // Predicated region
      $region33: #{gnn_wrapper_explain_forward.1} parent=11 // pred_check
        %p221 = pneg %p165
      $region34: #{gnn_wrapper_explain_forward.1} parent=11 // pred_check_branch
        %223 = sbr.rel (%p221) target = $region36
      $region35: #{gnn_wrapper_explain_forward.1} parent=11 // pred_region
        _
      $region36: #{gnn_wrapper_explain_forward.1} parent=11 // pred_fallthru
        _
    $region12: #{gnn_wrapper_explain_forward.1} parent=5 // pred_fallthru
      _
    %p224 = scmp.lt.s32.totalorder %s13, 2
    // Predicated region
    $region37: #{gnn_wrapper_explain_forward.1} parent=5 // pred_check
      %p225 = pneg %p224
    $region38: #{gnn_wrapper_explain_forward.1} parent=5 // pred_check_branch
      %227 = sbr.rel (%p225) target = $region40
    $region39: #{gnn_wrapper_explain_forward.1} parent=5 // pred_region
      // Predicated region
      $region41: #{gnn_wrapper_explain_forward.1} parent=39 // pred_check
        %p228 = pneg %p33
      $region42: #{gnn_wrapper_explain_forward.1} parent=39 // pred_check_branch
        %230 = sbr.rel (%p228) target = $region44
      $region43: #{gnn_wrapper_explain_forward.1} parent=39 // pred_region
        %s231 = smul.u32 16, %s13
        %p232 = scmp.lt.s32.totalorder %s231, 31
        %s233 = scalar_select %p232, %s231, 31
        %s234 = smul.addr %s233, 4
        %s235 = scalar_lea.vmem %s0, %s234
        %s236 = smul.u32 16, %s13
      $region44: #{gnn_wrapper_explain_forward.1} parent=39 // pred_fallthru
        _
    $region40: #{gnn_wrapper_explain_forward.1} parent=5 // pred_fallthru
      _
    %p237 = scmp.le.s32.totalorder 1, %s13
    %p238 = scmp.lt.s32.totalorder %s13, 3
    %p239 = pnand %p237, %p238
    %p240 = pneg %p239
    // Predicated region
    $region45: #{gnn_wrapper_explain_forward.1} parent=5 // pred_check
      _
    $region46: #{gnn_wrapper_explain_forward.1} parent=5 // pred_check_branch
      %242 = sbr.rel (%p239) target = $region48
    $region47: #{gnn_wrapper_explain_forward.1} parent=5 // pred_region
      %s243 = ssub.s32 %s13, 1
      %s244 = smul.u32 16, %s18
      %p245 = scmp.lt.s32.totalorder %s244, 31
      %s246 = scalar_select %p245, %s244, 31
      %s247 = smul.addr %s246, 4
      %s248 = scalar_lea.vmem %s0, %s247
      %p249 = pneg %p39
      %p250 = pneg %p36
      %p251 = pneg %p60
      %p252 = pneg %p57
      %p253 = pneg %p81
      %p254 = pneg %p78
      %p255 = pneg %p102
      %p256 = pneg %p99
      %p257 = pneg %p123
      %p258 = pneg %p120
      %p259 = pneg %p144
      %p260 = pneg %p141
      %p261 = pneg %p165
      %p262 = pneg %p162
      %p263 = pneg %p191
      %p264 = pneg %p188
      %s265 = smul.u32 16, %s18
      %p266 = scmp.lt.s32.totalorder %s265, 31
      %s267 = scalar_select %p266, %s265, 31
      %s268 = smul.addr %s267, 8
      %s269 = scalar_lea.vmem %s7, %s268
      %s270 = smul.u32 16, %s18
      %p271 = scmp.lt.s32.totalorder %s270, 31
      %s272 = scalar_select %p271, %s270, 31
      %s273 = smul.addr %s272, 4
      %s274 = scalar_lea.vmem %s0, %s273
      %s275 = smul.u32 16, %s18
      %s276 = smul.u32 16, %s18
      %p277 = scmp.lt.s32.totalorder %s276, 31
      %s278 = scalar_select %p277, %s276, 31
      %s279 = smul.addr %s278, 8
      %s280 = scalar_lea.vmem %s7, %s279
      %s281 = smul.u32 16, %s18
      %v283 = vld [vmem:[%s274] sm:$0xf]
      %v284 = vld [vmem:[%s274 + $0x4] sm:$0xf]
      %v285 = vld [vmem:[%s274 + $0x8] sm:$0xf]
      %v286 = vld [vmem:[%s274 + $0xc] sm:$0xf]
      %v287 = vld [vmem:[%s274 + $0x10] sm:$0xf]
      %v288 = vld [vmem:[%s274 + $0x14] sm:$0xf]
      %v289 = vld [vmem:[%s274 + $0x18] sm:$0xf]
      %v290 = vld [vmem:[%s274 + $0x1c] sm:$0xf]
      %v291 = vld [vmem:[%s274 + $0x20] sm:$0xf]
      %v292 = vld [vmem:[%s274 + $0x24] sm:$0xf]
      %v293 = vld [vmem:[%s274 + $0x28] sm:$0xf]
      %v294 = vld [vmem:[%s274 + $0x2c] sm:$0xf]
      %v295 = vld [vmem:[%s274 + $0x30] sm:$0xf]
      %v296 = vld [vmem:[%s274 + $0x34] sm:$0xf]
      %v297 = vld [vmem:[%s274 + $0x38] sm:$0xf]
      %v298 = vld [vmem:[%s274 + $0x3c] sm:$0xf]
      %v299 = vld [vmem:[%s1] sm:$0xff]
      %v300 = vld [vmem:[%s1 + $0x8] sm:$0xff]
      %v301 = vld [vmem:[%s1 + $0x10] sm:$0xff]
      %v302 = vld [vmem:[%s1 + $0x18] sm:$0xff]
      %v303 = vld [vmem:[%s1 + $0x20] sm:$0xff]
      %v304 = vld [vmem:[%s1 + $0x28] sm:$0xff]
      %v305 = vld [vmem:[%s1 + $0x30] sm:$0xff]
      %v306 = vld [vmem:[%s1 + $0x38] sm:$0xff]
      %v307 = vld [vmem:[%s1 + $0x40] sm:$0xff]
      %v308 = vld [vmem:[%s1 + $0x48] sm:$0xff]
      %v309 = vld [vmem:[%s1 + $0x50] sm:$0xff]
      %v310 = vld [vmem:[%s1 + $0x58] sm:$0xff]
      %v311 = vld [vmem:[%s1 + $0x60] sm:$0xff]
      %v312 = vld [vmem:[%s1 + $0x68] sm:$0xff]
      %v313 = vld [vmem:[%s1 + $0x70] sm:$0xff]
      %v314 = vld [vmem:[%s1 + $0x78] sm:$0xff]
      %v315 = vld [vmem:[%s1 + $0x80] sm:$0xff]
      %v316 = vld [vmem:[%s1 + $0x88] sm:$0xff]
      %v317 = vld [vmem:[%s1 + $0x90] sm:$0xff]
      %v318 = vld [vmem:[%s1 + $0x98] sm:$0xff]
      %v319 = vld [vmem:[%s1 + $0xa0] sm:$0xff]
      %v320 = vld [vmem:[%s1 + $0xa8] sm:$0xff]
      %v321 = vld [vmem:[%s1 + $0xb0] sm:$0xff]
      %v322 = vld [vmem:[%s1 + $0xb8] sm:$0xff]
      %v323 = vld [vmem:[%s1 + $0xc0] sm:$0xff]
      %v324 = vld [vmem:[%s1 + $0xc8] sm:$0xff]
      %v325 = vld [vmem:[%s1 + $0xd0] sm:$0xff]
      %v326 = vld [vmem:[%s1 + $0xd8] sm:$0xff]
      %v327 = vld [vmem:[%s1 + $0xe0] sm:$0xff]
      %v328 = vld [vmem:[%s1 + $0xe8] sm:$0xff]
      %v329 = vld [vmem:[%s1 + $0xf0] sm:$0xff]
      %v330 = vld [vmem:[%s1 + $0xf8] sm:$0xff]
      %v331 = vld [vmem:[%s2] sm:$0xf]
      %v333 = vlaneseq
      %v334 = vshrl.u32 %v333, 7
      %v335 = vsub.s32 0, %v334
      %v336 = vrot.slane %v331, %v335
      %v337 = vlaneseq
      %v338 = vshrl.u32 %v337, 7
      %v339 = vsub.s32 1, %v338
      %v340 = vrot.slane %v331, %v339
      %v341 = vlaneseq
      %v342 = vshrl.u32 %v341, 7
      %v343 = vsub.s32 2, %v342
      %v344 = vrot.slane %v331, %v343
      %v345 = vlaneseq
      %v346 = vshrl.u32 %v345, 7
      %v347 = vsub.s32 3, %v346
      %v348 = vrot.slane %v331, %v347
      %v369 = vunpack.c.l.b16 %v283
      %v370 = vunpack.c.l.b16 %v284
      %v371 = vunpack.c.l.b16 %v285
      %v372 = vunpack.c.l.b16 %v286
      %v373 = vunpack.c.l.b16 %v287
      %v374 = vunpack.c.l.b16 %v288
      %v375 = vunpack.c.l.b16 %v289
      %v376 = vunpack.c.l.b16 %v290
      %v377 = vunpack.c.l.b16 %v291
      %v378 = vunpack.c.l.b16 %v292
      %v379 = vunpack.c.l.b16 %v293
      %v380 = vunpack.c.l.b16 %v294
      %v381 = vunpack.c.l.b16 %v295
      %v382 = vunpack.c.l.b16 %v296
      %v383 = vunpack.c.l.b16 %v297
      %v384 = vunpack.c.l.b16 %v298
      %v385 = vpack.c.b16 %v370, %v369
      %v386 = vpack.c.b16 %v372, %v371
      %v387 = vpack.c.b16 %v374, %v373
      %v388 = vpack.c.b16 %v376, %v375
      %v389 = vpack.c.b16 %v378, %v377
      %v390 = vpack.c.b16 %v380, %v379
      %v391 = vpack.c.b16 %v382, %v381
      %v392 = vpack.c.b16 %v384, %v383
      %v433 = vunpack.c.l.b16 %v299
      %v434 = vunpack.c.h.b16 %v299
      %v435 = vunpack.c.l.b16 %v300
      %v436 = vunpack.c.h.b16 %v300
      %v437 = vunpack.c.l.b16 %v301
      %v438 = vunpack.c.h.b16 %v301
      %v439 = vunpack.c.l.b16 %v302
      %v440 = vunpack.c.h.b16 %v302
      %v441 = vunpack.c.l.b16 %v303
      %v442 = vunpack.c.h.b16 %v303
      %v443 = vunpack.c.l.b16 %v304
      %v444 = vunpack.c.h.b16 %v304
      %v445 = vunpack.c.l.b16 %v305
      %v446 = vunpack.c.h.b16 %v305
      %v447 = vunpack.c.l.b16 %v306
      %v448 = vunpack.c.h.b16 %v306
      %v449 = vunpack.c.l.b16 %v307
      %v450 = vunpack.c.h.b16 %v307
      %v451 = vunpack.c.l.b16 %v308
      %v452 = vunpack.c.h.b16 %v308
      %v453 = vunpack.c.l.b16 %v309
      %v454 = vunpack.c.h.b16 %v309
      %v455 = vunpack.c.l.b16 %v310
      %v456 = vunpack.c.h.b16 %v310
      %v457 = vunpack.c.l.b16 %v311
      %v458 = vunpack.c.h.b16 %v311
      %v459 = vunpack.c.l.b16 %v312
      %v460 = vunpack.c.h.b16 %v312
      %v461 = vunpack.c.l.b16 %v313
      %v462 = vunpack.c.h.b16 %v313
      %v463 = vunpack.c.l.b16 %v314
      %v464 = vunpack.c.h.b16 %v314
      %v465 = vunpack.c.l.b16 %v315
      %v466 = vunpack.c.h.b16 %v315
      %v467 = vunpack.c.l.b16 %v316
      %v468 = vunpack.c.h.b16 %v316
      %v469 = vunpack.c.l.b16 %v317
      %v470 = vunpack.c.h.b16 %v317
      %v471 = vunpack.c.l.b16 %v318
      %v472 = vunpack.c.h.b16 %v318
      %v473 = vunpack.c.l.b16 %v319
      %v474 = vunpack.c.h.b16 %v319
      %v475 = vunpack.c.l.b16 %v320
      %v476 = vunpack.c.h.b16 %v320
      %v477 = vunpack.c.l.b16 %v321
      %v478 = vunpack.c.h.b16 %v321
      %v479 = vunpack.c.l.b16 %v322
      %v480 = vunpack.c.h.b16 %v322
      %v481 = vunpack.c.l.b16 %v323
      %v482 = vunpack.c.h.b16 %v323
      %v483 = vunpack.c.l.b16 %v324
      %v484 = vunpack.c.h.b16 %v324
      %v485 = vunpack.c.l.b16 %v325
      %v486 = vunpack.c.h.b16 %v325
      %v487 = vunpack.c.l.b16 %v326
      %v488 = vunpack.c.h.b16 %v326
      %v489 = vunpack.c.l.b16 %v327
      %v490 = vunpack.c.h.b16 %v327
      %v491 = vunpack.c.l.b16 %v328
      %v492 = vunpack.c.h.b16 %v328
      %v493 = vunpack.c.l.b16 %v329
      %v494 = vunpack.c.h.b16 %v329
      %v495 = vunpack.c.l.b16 %v330
      %v496 = vunpack.c.h.b16 %v330
      %v497 = vpack.c.b16 %v437, %v433
      %v498 = vpack.c.b16 %v438, %v434
      %v499 = vpack.c.b16 %v439, %v435
      %v500 = vpack.c.b16 %v440, %v436
      %v501 = vpack.c.b16 %v445, %v441
      %v502 = vpack.c.b16 %v446, %v442
      %v503 = vpack.c.b16 %v447, %v443
      %v504 = vpack.c.b16 %v448, %v444
      %v505 = vpack.c.b16 %v453, %v449
      %v506 = vpack.c.b16 %v454, %v450
      %v507 = vpack.c.b16 %v455, %v451
      %v508 = vpack.c.b16 %v456, %v452
      %v509 = vpack.c.b16 %v461, %v457
      %v510 = vpack.c.b16 %v462, %v458
      %v511 = vpack.c.b16 %v463, %v459
      %v512 = vpack.c.b16 %v464, %v460
      %v513 = vpack.c.b16 %v469, %v465
      %v514 = vpack.c.b16 %v470, %v466
      %v515 = vpack.c.b16 %v471, %v467
      %v516 = vpack.c.b16 %v472, %v468
      %v517 = vpack.c.b16 %v477, %v473
      %v518 = vpack.c.b16 %v478, %v474
      %v519 = vpack.c.b16 %v479, %v475
      %v520 = vpack.c.b16 %v480, %v476
      %v521 = vpack.c.b16 %v485, %v481
      %v522 = vpack.c.b16 %v486, %v482
      %v523 = vpack.c.b16 %v487, %v483
      %v524 = vpack.c.b16 %v488, %v484
      %v525 = vpack.c.b16 %v493, %v489
      %v526 = vpack.c.b16 %v494, %v490
      %v527 = vpack.c.b16 %v495, %v491
      %v528 = vpack.c.b16 %v496, %v492
      %561 = vmatprep.subr.bf16.mxu0 %v526
      %562 = vmatpush1.bf16.msra.mxu0 %v525
      %563 = vmatprep.subr.bf16.mxu0 %v522
      %564 = vmatpush1.bf16.msra.mxu0 %v521
      %565 = vmatprep.subr.bf16.mxu0 %v518
      %566 = vmatpush1.bf16.msra.mxu0 %v517
      %567 = vmatprep.subr.bf16.mxu0 %v514
      %568 = vmatpush1.bf16.msra.mxu0 %v513
      %569 = vmatprep.subr.bf16.mxu0 %v510
      %570 = vmatpush1.bf16.msra.mxu0 %v509
      %571 = vmatprep.subr.bf16.mxu0 %v506
      %572 = vmatpush1.bf16.msra.mxu0 %v505
      %573 = vmatprep.subr.bf16.mxu0 %v502
      %574 = vmatpush1.bf16.msra.mxu0 %v501
      %575 = vmatprep.subr.bf16.mxu0 %v498
      %576 = vmatpush1.bf16.msra.mxu0 %v497
      %577 = vmatprep.subr.bf16.mxu0 0
      %578 = vmatpush2.bf16.msra.mxu0 0
      %579 = vmatprep.subr.bf16.mxu0 0
      %580 = vmatpush2.bf16.msra.mxu0 0
      %581 = vmatprep.subr.bf16.mxu0 0
      %582 = vmatpush2.bf16.msra.mxu0 0
      %583 = vmatprep.subr.bf16.mxu0 0
      %584 = vmatpush2.bf16.msra.mxu0 0
      %585 = vmatprep.subr.bf16.mxu0 0
      %586 = vmatpush2.bf16.msra.mxu0 0
      %587 = vmatprep.subr.bf16.mxu0 0
      %588 = vmatpush2.bf16.msra.mxu0 0
      %589 = vmatprep.subr.bf16.mxu0 0
      %590 = vmatpush2.bf16.msra.mxu0 0
      %591 = vmatprep.subr.bf16.mxu0 0
      %592 = vmatpush2.bf16.msra.mxu0 0
      %593 = vmatprep.mubr.bf16.mxu0 0
      %594 = vmatmul.mubr.bf16.gmra.mxu0 %v385
      %v595 = vpop.f32.mrf.mxu0
      %v596 = vadd.f32 %v336, %v595
      %v597 = vpop.f32.mrf.mxu0
      %v598 = vadd.f32 %v340, %v597
      %v599 = vpop.f32.mrf.mxu0
      %v600 = vadd.f32 %v336, %v599
      %v601 = vpop.f32.mrf.mxu0
      %v602 = vadd.f32 %v340, %v601
      %603 = vmatprep.mubr.bf16.mxu0 0
      %604 = vmatmul.mubr.bf16.gmra.mxu0 %v386
      %v605 = vpop.f32.mrf.mxu0
      %v606 = vadd.f32 %v336, %v605
      %v607 = vpop.f32.mrf.mxu0
      %v608 = vadd.f32 %v340, %v607
      %v609 = vpop.f32.mrf.mxu0
      %v610 = vadd.f32 %v336, %v609
      %v611 = vpop.f32.mrf.mxu0
      %v612 = vadd.f32 %v340, %v611
      %613 = vmatprep.mubr.bf16.mxu0 0
      %614 = vmatmul.mubr.bf16.gmra.mxu0 %v387
      %v615 = vpop.f32.mrf.mxu0
      %v616 = vadd.f32 %v336, %v615
      %v617 = vpop.f32.mrf.mxu0
      %v618 = vadd.f32 %v340, %v617
      %v619 = vpop.f32.mrf.mxu0
      %v620 = vadd.f32 %v336, %v619
      %v621 = vpop.f32.mrf.mxu0
      %v622 = vadd.f32 %v340, %v621
      %623 = vmatprep.mubr.bf16.mxu0 0
      %624 = vmatmul.mubr.bf16.gmra.mxu0 %v388
      %v625 = vpop.f32.mrf.mxu0
      %v626 = vadd.f32 %v336, %v625
      %v627 = vpop.f32.mrf.mxu0
      %v628 = vadd.f32 %v340, %v627
      %v629 = vpop.f32.mrf.mxu0
      %v630 = vadd.f32 %v336, %v629
      %v631 = vpop.f32.mrf.mxu0
      %v632 = vadd.f32 %v340, %v631
      %633 = vmatprep.mubr.bf16.mxu0 0
      %634 = vmatmul.mubr.bf16.gmra.mxu0 %v389
      %v635 = vpop.f32.mrf.mxu0
      %v636 = vadd.f32 %v336, %v635
      %v637 = vpop.f32.mrf.mxu0
      %v638 = vadd.f32 %v340, %v637
      %v639 = vpop.f32.mrf.mxu0
      %v640 = vadd.f32 %v336, %v639
      %v641 = vpop.f32.mrf.mxu0
      %v642 = vadd.f32 %v340, %v641
      %643 = vmatprep.mubr.bf16.mxu0 0
      %644 = vmatmul.mubr.bf16.gmra.mxu0 %v390
      %v645 = vpop.f32.mrf.mxu0
      %v646 = vadd.f32 %v336, %v645
      %v647 = vpop.f32.mrf.mxu0
      %v648 = vadd.f32 %v340, %v647
      %v649 = vpop.f32.mrf.mxu0
      %v650 = vadd.f32 %v336, %v649
      %v651 = vpop.f32.mrf.mxu0
      %v652 = vadd.f32 %v340, %v651
      %653 = vmatprep.mubr.bf16.mxu0 0
      %654 = vmatmul.mubr.bf16.gmra.mxu0 %v391
      %v655 = vpop.f32.mrf.mxu0
      %v656 = vadd.f32 %v336, %v655
      %v657 = vpop.f32.mrf.mxu0
      %v658 = vadd.f32 %v340, %v657
      %v659 = vpop.f32.mrf.mxu0
      %v660 = vadd.f32 %v336, %v659
      %v661 = vpop.f32.mrf.mxu0
      %v662 = vadd.f32 %v340, %v661
      %663 = vmatprep.mubr.bf16.mxu0 0
      %664 = vmatmul.mubr.bf16.gmra.mxu0 %v392
      %v665 = vpop.f32.mrf.mxu0
      %v666 = vadd.f32 %v336, %v665
      %v667 = vpop.f32.mrf.mxu0
      %v668 = vadd.f32 %v340, %v667
      %v669 = vpop.f32.mrf.mxu0
      %v670 = vadd.f32 %v336, %v669
      %v671 = vpop.f32.mrf.mxu0
      %v672 = vadd.f32 %v340, %v671
      %673 = vdwg.mxu0
      %674 = vmatprep.subr.bf16.mxu0 %v528
      %675 = vmatpush1.bf16.msra.mxu0 %v527
      %676 = vmatprep.subr.bf16.mxu0 %v524
      %677 = vmatpush1.bf16.msra.mxu0 %v523
      %678 = vmatprep.subr.bf16.mxu0 %v520
      %679 = vmatpush1.bf16.msra.mxu0 %v519
      %680 = vmatprep.subr.bf16.mxu0 %v516
      %681 = vmatpush1.bf16.msra.mxu0 %v515
      %682 = vmatprep.subr.bf16.mxu0 %v512
      %683 = vmatpush1.bf16.msra.mxu0 %v511
      %684 = vmatprep.subr.bf16.mxu0 %v508
      %685 = vmatpush1.bf16.msra.mxu0 %v507
      %686 = vmatprep.subr.bf16.mxu0 %v504
      %687 = vmatpush1.bf16.msra.mxu0 %v503
      %688 = vmatprep.subr.bf16.mxu0 %v500
      %689 = vmatpush1.bf16.msra.mxu0 %v499
      %690 = vmatprep.subr.bf16.mxu0 0
      %691 = vmatpush2.bf16.msra.mxu0 0
      %692 = vmatprep.subr.bf16.mxu0 0
      %693 = vmatpush2.bf16.msra.mxu0 0
      %694 = vmatprep.subr.bf16.mxu0 0
      %695 = vmatpush2.bf16.msra.mxu0 0
      %696 = vmatprep.subr.bf16.mxu0 0
      %697 = vmatpush2.bf16.msra.mxu0 0
      %698 = vmatprep.subr.bf16.mxu0 0
      %699 = vmatpush2.bf16.msra.mxu0 0
      %700 = vmatprep.subr.bf16.mxu0 0
      %701 = vmatpush2.bf16.msra.mxu0 0
      %702 = vmatprep.subr.bf16.mxu0 0
      %703 = vmatpush2.bf16.msra.mxu0 0
      %704 = vmatprep.subr.bf16.mxu0 0
      %705 = vmatpush2.bf16.msra.mxu0 0
      %706 = vmatprep.mubr.bf16.mxu0 0
      %707 = vmatmul.mubr.bf16.gmra.mxu0 %v385
      %v708 = vpop.f32.mrf.mxu0
      %v709 = vadd.f32 %v344, %v708
      %v710 = vpop.f32.mrf.mxu0
      %v711 = vadd.f32 %v348, %v710
      %v712 = vpop.f32.mrf.mxu0
      %v713 = vadd.f32 %v344, %v712
      %v714 = vpop.f32.mrf.mxu0
      %v715 = vadd.f32 %v348, %v714
      %716 = vmatprep.mubr.bf16.mxu0 0
      %717 = vmatmul.mubr.bf16.gmra.mxu0 %v386
      %v718 = vpop.f32.mrf.mxu0
      %v719 = vadd.f32 %v344, %v718
      %v720 = vpop.f32.mrf.mxu0
      %v721 = vadd.f32 %v348, %v720
      %v722 = vpop.f32.mrf.mxu0
      %v723 = vadd.f32 %v344, %v722
      %v724 = vpop.f32.mrf.mxu0
      %v725 = vadd.f32 %v348, %v724
      %726 = vmatprep.mubr.bf16.mxu0 0
      %727 = vmatmul.mubr.bf16.gmra.mxu0 %v387
      %v728 = vpop.f32.mrf.mxu0
      %v729 = vadd.f32 %v344, %v728
      %v730 = vpop.f32.mrf.mxu0
      %v731 = vadd.f32 %v348, %v730
      %v732 = vpop.f32.mrf.mxu0
      %v733 = vadd.f32 %v344, %v732
      %v734 = vpop.f32.mrf.mxu0
      %v735 = vadd.f32 %v348, %v734
      %736 = vmatprep.mubr.bf16.mxu0 0
      %737 = vmatmul.mubr.bf16.gmra.mxu0 %v388
      %v738 = vpop.f32.mrf.mxu0
      %v739 = vadd.f32 %v344, %v738
      %v740 = vpop.f32.mrf.mxu0
      %v741 = vadd.f32 %v348, %v740
      %v742 = vpop.f32.mrf.mxu0
      %v743 = vadd.f32 %v344, %v742
      %v744 = vpop.f32.mrf.mxu0
      %v745 = vadd.f32 %v348, %v744
      %746 = vmatprep.mubr.bf16.mxu0 0
      %747 = vmatmul.mubr.bf16.gmra.mxu0 %v389
      %v748 = vpop.f32.mrf.mxu0
      %v749 = vadd.f32 %v344, %v748
      %v750 = vpop.f32.mrf.mxu0
      %v751 = vadd.f32 %v348, %v750
      %v752 = vpop.f32.mrf.mxu0
      %v753 = vadd.f32 %v344, %v752
      %v754 = vpop.f32.mrf.mxu0
      %v755 = vadd.f32 %v348, %v754
      %756 = vmatprep.mubr.bf16.mxu0 0
      %757 = vmatmul.mubr.bf16.gmra.mxu0 %v390
      %v758 = vpop.f32.mrf.mxu0
      %v759 = vadd.f32 %v344, %v758
      %v760 = vpop.f32.mrf.mxu0
      %v761 = vadd.f32 %v348, %v760
      %v762 = vpop.f32.mrf.mxu0
      %v763 = vadd.f32 %v344, %v762
      %v764 = vpop.f32.mrf.mxu0
      %v765 = vadd.f32 %v348, %v764
      %766 = vmatprep.mubr.bf16.mxu0 0
      %767 = vmatmul.mubr.bf16.gmra.mxu0 %v391
      %v768 = vpop.f32.mrf.mxu0
      %v769 = vadd.f32 %v344, %v768
      %v770 = vpop.f32.mrf.mxu0
      %v771 = vadd.f32 %v348, %v770
      %v772 = vpop.f32.mrf.mxu0
      %v773 = vadd.f32 %v344, %v772
      %v774 = vpop.f32.mrf.mxu0
      %v775 = vadd.f32 %v348, %v774
      %776 = vmatprep.mubr.bf16.mxu0 0
      %777 = vmatmul.mubr.bf16.gmra.mxu0 %v392
      %v778 = vpop.f32.mrf.mxu0
      %v779 = vadd.f32 %v344, %v778
      %v780 = vpop.f32.mrf.mxu0
      %v781 = vadd.f32 %v348, %v780
      %v782 = vpop.f32.mrf.mxu0
      %v783 = vadd.f32 %v344, %v782
      %v784 = vpop.f32.mrf.mxu0
      %v785 = vadd.f32 %v348, %v784
      %786 = vdwg.mxu0
      %v787 = vmax.f32 %v596, 0.0
      %v788 = vmax.f32 %v598, 0.0
      %v789 = vmax.f32 %v709, 0.0
      %v790 = vmax.f32 %v711, 0.0
      %v791 = vmax.f32 %v600, 0.0
      %v792 = vmax.f32 %v602, 0.0
      %v793 = vmax.f32 %v713, 0.0
      %v794 = vmax.f32 %v715, 0.0
      %v795 = vmax.f32 %v606, 0.0
      %v796 = vmax.f32 %v608, 0.0
      %v797 = vmax.f32 %v719, 0.0
      %v798 = vmax.f32 %v721, 0.0
      %v799 = vmax.f32 %v610, 0.0
      %v800 = vmax.f32 %v612, 0.0
      %v801 = vmax.f32 %v723, 0.0
      %v802 = vmax.f32 %v725, 0.0
      %v803 = vmax.f32 %v616, 0.0
      %v804 = vmax.f32 %v618, 0.0
      %v805 = vmax.f32 %v729, 0.0
      %v806 = vmax.f32 %v731, 0.0
      %v807 = vmax.f32 %v620, 0.0
      %v808 = vmax.f32 %v622, 0.0
      %v809 = vmax.f32 %v733, 0.0
      %v810 = vmax.f32 %v735, 0.0
      %v811 = vmax.f32 %v626, 0.0
      %v812 = vmax.f32 %v628, 0.0
      %v813 = vmax.f32 %v739, 0.0
      %v814 = vmax.f32 %v741, 0.0
      %v815 = vmax.f32 %v630, 0.0
      %v816 = vmax.f32 %v632, 0.0
      %v817 = vmax.f32 %v743, 0.0
      %v818 = vmax.f32 %v745, 0.0
      %v819 = vmax.f32 %v636, 0.0
      %v820 = vmax.f32 %v638, 0.0
      %v821 = vmax.f32 %v749, 0.0
      %v822 = vmax.f32 %v751, 0.0
      %v823 = vmax.f32 %v640, 0.0
      %v824 = vmax.f32 %v642, 0.0
      %v825 = vmax.f32 %v753, 0.0
      %v826 = vmax.f32 %v755, 0.0
      %v827 = vmax.f32 %v646, 0.0
      %v828 = vmax.f32 %v648, 0.0
      %v829 = vmax.f32 %v759, 0.0
      %v830 = vmax.f32 %v761, 0.0
      %v831 = vmax.f32 %v650, 0.0
      %v832 = vmax.f32 %v652, 0.0
      %v833 = vmax.f32 %v763, 0.0
      %v834 = vmax.f32 %v765, 0.0
      %v835 = vmax.f32 %v656, 0.0
      %v836 = vmax.f32 %v658, 0.0
      %v837 = vmax.f32 %v769, 0.0
      %v838 = vmax.f32 %v771, 0.0
      %v839 = vmax.f32 %v660, 0.0
      %v840 = vmax.f32 %v662, 0.0
      %v841 = vmax.f32 %v773, 0.0
      %v842 = vmax.f32 %v775, 0.0
      %v843 = vmax.f32 %v666, 0.0
      %v844 = vmax.f32 %v668, 0.0
      %v845 = vmax.f32 %v779, 0.0
      %v846 = vmax.f32 %v781, 0.0
      %v847 = vmax.f32 %v670, 0.0
      %v848 = vmax.f32 %v672, 0.0
      %v849 = vmax.f32 %v783, 0.0
      %v850 = vmax.f32 %v785, 0.0
      %v851 = vpack.c.bf16 %v791, %v787
      %v852 = vpack.c.bf16 %v792, %v788
      %v853 = vpack.c.bf16 %v793, %v789
      %v854 = vpack.c.bf16 %v794, %v790
      %v855 = vpack.c.bf16 %v799, %v795
      %v856 = vpack.c.bf16 %v800, %v796
      %v857 = vpack.c.bf16 %v801, %v797
      %v858 = vpack.c.bf16 %v802, %v798
      %v859 = vpack.c.bf16 %v807, %v803
      %v860 = vpack.c.bf16 %v808, %v804
      %v861 = vpack.c.bf16 %v809, %v805
      %v862 = vpack.c.bf16 %v810, %v806
      %v863 = vpack.c.bf16 %v815, %v811
      %v864 = vpack.c.bf16 %v816, %v812
      %v865 = vpack.c.bf16 %v817, %v813
      %v866 = vpack.c.bf16 %v818, %v814
      %v867 = vpack.c.bf16 %v823, %v819
      %v868 = vpack.c.bf16 %v824, %v820
      %v869 = vpack.c.bf16 %v825, %v821
      %v870 = vpack.c.bf16 %v826, %v822
      %v871 = vpack.c.bf16 %v831, %v827
      %v872 = vpack.c.bf16 %v832, %v828
      %v873 = vpack.c.bf16 %v833, %v829
      %v874 = vpack.c.bf16 %v834, %v830
      %v875 = vpack.c.bf16 %v839, %v835
      %v876 = vpack.c.bf16 %v840, %v836
      %v877 = vpack.c.bf16 %v841, %v837
      %v878 = vpack.c.bf16 %v842, %v838
      %v879 = vpack.c.bf16 %v847, %v843
      %v880 = vpack.c.bf16 %v848, %v844
      %v881 = vpack.c.bf16 %v849, %v845
      %v882 = vpack.c.bf16 %v850, %v846
      %v883 = vld [vmem:[%s3] sm:$0xff]
      %v884 = vld [vmem:[%s3 + $0x8] sm:$0xff]
      %v885 = vld [vmem:[%s3 + $0x10] sm:$0xff]
      %v886 = vld [vmem:[%s3 + $0x18] sm:$0xff]
      %v887 = vld [vmem:[%s3 + $0x20] sm:$0xff]
      %v888 = vld [vmem:[%s3 + $0x28] sm:$0xff]
      %v889 = vld [vmem:[%s3 + $0x30] sm:$0xff]
      %v890 = vld [vmem:[%s3 + $0x38] sm:$0xff]
      %v891 = vld [vmem:[%s3 + $0x40] sm:$0xff]
      %v892 = vld [vmem:[%s3 + $0x48] sm:$0xff]
      %v893 = vld [vmem:[%s3 + $0x50] sm:$0xff]
      %v894 = vld [vmem:[%s3 + $0x58] sm:$0xff]
      %v895 = vld [vmem:[%s3 + $0x60] sm:$0xff]
      %v896 = vld [vmem:[%s3 + $0x68] sm:$0xff]
      %v897 = vld [vmem:[%s3 + $0x70] sm:$0xff]
      %v898 = vld [vmem:[%s3 + $0x78] sm:$0xff]
      %v899 = vld [vmem:[%s3 + $0x80] sm:$0xff]
      %v900 = vld [vmem:[%s3 + $0x88] sm:$0xff]
      %v901 = vld [vmem:[%s3 + $0x90] sm:$0xff]
      %v902 = vld [vmem:[%s3 + $0x98] sm:$0xff]
      %v903 = vld [vmem:[%s3 + $0xa0] sm:$0xff]
      %v904 = vld [vmem:[%s3 + $0xa8] sm:$0xff]
      %v905 = vld [vmem:[%s3 + $0xb0] sm:$0xff]
      %v906 = vld [vmem:[%s3 + $0xb8] sm:$0xff]
      %v907 = vld [vmem:[%s3 + $0xc0] sm:$0xff]
      %v908 = vld [vmem:[%s3 + $0xc8] sm:$0xff]
      %v909 = vld [vmem:[%s3 + $0xd0] sm:$0xff]
      %v910 = vld [vmem:[%s3 + $0xd8] sm:$0xff]
      %v911 = vld [vmem:[%s3 + $0xe0] sm:$0xff]
      %v912 = vld [vmem:[%s3 + $0xe8] sm:$0xff]
      %v913 = vld [vmem:[%s3 + $0xf0] sm:$0xff]
      %v914 = vld [vmem:[%s3 + $0xf8] sm:$0xff]
      %v915 = vld [vmem:[%s3 + $0x100] sm:$0xff]
      %v916 = vld [vmem:[%s3 + $0x108] sm:$0xff]
      %v917 = vld [vmem:[%s3 + $0x110] sm:$0xff]
      %v918 = vld [vmem:[%s3 + $0x118] sm:$0xff]
      %v919 = vld [vmem:[%s3 + $0x120] sm:$0xff]
      %v920 = vld [vmem:[%s3 + $0x128] sm:$0xff]
      %v921 = vld [vmem:[%s3 + $0x130] sm:$0xff]
      %v922 = vld [vmem:[%s3 + $0x138] sm:$0xff]
      %v923 = vld [vmem:[%s3 + $0x140] sm:$0xff]
      %v924 = vld [vmem:[%s3 + $0x148] sm:$0xff]
      %v925 = vld [vmem:[%s3 + $0x150] sm:$0xff]
      %v926 = vld [vmem:[%s3 + $0x158] sm:$0xff]
      %v927 = vld [vmem:[%s3 + $0x160] sm:$0xff]
      %v928 = vld [vmem:[%s3 + $0x168] sm:$0xff]
      %v929 = vld [vmem:[%s3 + $0x170] sm:$0xff]
      %v930 = vld [vmem:[%s3 + $0x178] sm:$0xff]
      %v931 = vld [vmem:[%s3 + $0x180] sm:$0xff]
      %v932 = vld [vmem:[%s3 + $0x188] sm:$0xff]
      %v933 = vld [vmem:[%s3 + $0x190] sm:$0xff]
      %v934 = vld [vmem:[%s3 + $0x198] sm:$0xff]
      %v935 = vld [vmem:[%s3 + $0x1a0] sm:$0xff]
      %v936 = vld [vmem:[%s3 + $0x1a8] sm:$0xff]
      %v937 = vld [vmem:[%s3 + $0x1b0] sm:$0xff]
      %v938 = vld [vmem:[%s3 + $0x1b8] sm:$0xff]
      %v939 = vld [vmem:[%s3 + $0x1c0] sm:$0xff]
      %v940 = vld [vmem:[%s3 + $0x1c8] sm:$0xff]
      %v941 = vld [vmem:[%s3 + $0x1d0] sm:$0xff]
      %v942 = vld [vmem:[%s3 + $0x1d8] sm:$0xff]
      %v943 = vld [vmem:[%s3 + $0x1e0] sm:$0xff]
      %v944 = vld [vmem:[%s3 + $0x1e8] sm:$0xff]
      %v945 = vld [vmem:[%s3 + $0x1f0] sm:$0xff]
      %v946 = vld [vmem:[%s3 + $0x1f8] sm:$0xff]
      %v947 = vld [vmem:[%s3 + $0x200] sm:$0xff]
      %v948 = vld [vmem:[%s3 + $0x208] sm:$0xff]
      %v949 = vld [vmem:[%s3 + $0x210] sm:$0xff]
      %v950 = vld [vmem:[%s3 + $0x218] sm:$0xff]
      %v951 = vld [vmem:[%s3 + $0x220] sm:$0xff]
      %v952 = vld [vmem:[%s3 + $0x228] sm:$0xff]
      %v953 = vld [vmem:[%s3 + $0x230] sm:$0xff]
      %v954 = vld [vmem:[%s3 + $0x238] sm:$0xff]
      %v955 = vld [vmem:[%s3 + $0x240] sm:$0xff]
      %v956 = vld [vmem:[%s3 + $0x248] sm:$0xff]
      %v957 = vld [vmem:[%s3 + $0x250] sm:$0xff]
      %v958 = vld [vmem:[%s3 + $0x258] sm:$0xff]
      %v959 = vld [vmem:[%s3 + $0x260] sm:$0xff]
      %v960 = vld [vmem:[%s3 + $0x268] sm:$0xff]
      %v961 = vld [vmem:[%s3 + $0x270] sm:$0xff]
      %v962 = vld [vmem:[%s3 + $0x278] sm:$0xff]
      %v963 = vld [vmem:[%s3 + $0x280] sm:$0xff]
      %v964 = vld [vmem:[%s3 + $0x288] sm:$0xff]
      %v965 = vld [vmem:[%s3 + $0x290] sm:$0xff]
      %v966 = vld [vmem:[%s3 + $0x298] sm:$0xff]
      %v967 = vld [vmem:[%s3 + $0x2a0] sm:$0xff]
      %v968 = vld [vmem:[%s3 + $0x2a8] sm:$0xff]
      %v969 = vld [vmem:[%s3 + $0x2b0] sm:$0xff]
      %v970 = vld [vmem:[%s3 + $0x2b8] sm:$0xff]
      %v971 = vld [vmem:[%s3 + $0x2c0] sm:$0xff]
      %v972 = vld [vmem:[%s3 + $0x2c8] sm:$0xff]
      %v973 = vld [vmem:[%s3 + $0x2d0] sm:$0xff]
      %v974 = vld [vmem:[%s3 + $0x2d8] sm:$0xff]
      %v975 = vld [vmem:[%s3 + $0x2e0] sm:$0xff]
      %v976 = vld [vmem:[%s3 + $0x2e8] sm:$0xff]
      %v977 = vld [vmem:[%s3 + $0x2f0] sm:$0xff]
      %v978 = vld [vmem:[%s3 + $0x2f8] sm:$0xff]
      %v979 = vld [vmem:[%s3 + $0x300] sm:$0xff]
      %v980 = vld [vmem:[%s3 + $0x308] sm:$0xff]
      %v981 = vld [vmem:[%s3 + $0x310] sm:$0xff]
      %v982 = vld [vmem:[%s3 + $0x318] sm:$0xff]
      %v983 = vld [vmem:[%s3 + $0x320] sm:$0xff]
      %v984 = vld [vmem:[%s3 + $0x328] sm:$0xff]
      %v985 = vld [vmem:[%s3 + $0x330] sm:$0xff]
      %v986 = vld [vmem:[%s3 + $0x338] sm:$0xff]
      %v987 = vld [vmem:[%s3 + $0x340] sm:$0xff]
      %v988 = vld [vmem:[%s3 + $0x348] sm:$0xff]
      %v989 = vld [vmem:[%s3 + $0x350] sm:$0xff]
      %v990 = vld [vmem:[%s3 + $0x358] sm:$0xff]
      %v991 = vld [vmem:[%s3 + $0x360] sm:$0xff]
      %v992 = vld [vmem:[%s3 + $0x368] sm:$0xff]
      %v993 = vld [vmem:[%s3 + $0x370] sm:$0xff]
      %v994 = vld [vmem:[%s3 + $0x378] sm:$0xff]
      %v995 = vld [vmem:[%s3 + $0x380] sm:$0xff]
      %v996 = vld [vmem:[%s3 + $0x388] sm:$0xff]
      %v997 = vld [vmem:[%s3 + $0x390] sm:$0xff]
      %v998 = vld [vmem:[%s3 + $0x398] sm:$0xff]
      %v999 = vld [vmem:[%s3 + $0x3a0] sm:$0xff]
      %v1000 = vld [vmem:[%s3 + $0x3a8] sm:$0xff]
      %v1001 = vld [vmem:[%s3 + $0x3b0] sm:$0xff]
      %v1002 = vld [vmem:[%s3 + $0x3b8] sm:$0xff]
      %v1003 = vld [vmem:[%s3 + $0x3c0] sm:$0xff]
      %v1004 = vld [vmem:[%s3 + $0x3c8] sm:$0xff]
      %v1005 = vld [vmem:[%s3 + $0x3d0] sm:$0xff]
      %v1006 = vld [vmem:[%s3 + $0x3d8] sm:$0xff]
      %v1007 = vld [vmem:[%s3 + $0x3e0] sm:$0xff]
      %v1008 = vld [vmem:[%s3 + $0x3e8] sm:$0xff]
      %v1009 = vld [vmem:[%s3 + $0x3f0] sm:$0xff]
      %v1010 = vld [vmem:[%s3 + $0x3f8] sm:$0xff]
      %v1011 = vld [vmem:[%s4] sm:$0xf]
      %v1013 = vlaneseq
      %v1014 = vshrl.u32 %v1013, 7
      %v1015 = vsub.s32 0, %v1014
      %v1016 = vrot.slane %v1011, %v1015
      %v1017 = vlaneseq
      %v1018 = vshrl.u32 %v1017, 7
      %v1019 = vsub.s32 1, %v1018
      %v1020 = vrot.slane %v1011, %v1019
      %v1021 = vlaneseq
      %v1022 = vshrl.u32 %v1021, 7
      %v1023 = vsub.s32 2, %v1022
      %v1024 = vrot.slane %v1011, %v1023
      %v1025 = vlaneseq
      %v1026 = vshrl.u32 %v1025, 7
      %v1027 = vsub.s32 3, %v1026
      %v1028 = vrot.slane %v1011, %v1027
      %v1161 = vunpack.c.l.b16 %v883
      %v1162 = vunpack.c.h.b16 %v883
      %v1163 = vunpack.c.l.b16 %v884
      %v1164 = vunpack.c.h.b16 %v884
      %v1165 = vunpack.c.l.b16 %v885
      %v1166 = vunpack.c.h.b16 %v885
      %v1167 = vunpack.c.l.b16 %v886
      %v1168 = vunpack.c.h.b16 %v886
      %v1169 = vunpack.c.l.b16 %v887
      %v1170 = vunpack.c.h.b16 %v887
      %v1171 = vunpack.c.l.b16 %v888
      %v1172 = vunpack.c.h.b16 %v888
      %v1173 = vunpack.c.l.b16 %v889
      %v1174 = vunpack.c.h.b16 %v889
      %v1175 = vunpack.c.l.b16 %v890
      %v1176 = vunpack.c.h.b16 %v890
      %v1177 = vunpack.c.l.b16 %v891
      %v1178 = vunpack.c.h.b16 %v891
      %v1179 = vunpack.c.l.b16 %v892
      %v1180 = vunpack.c.h.b16 %v892
      %v1181 = vunpack.c.l.b16 %v893
      %v1182 = vunpack.c.h.b16 %v893
      %v1183 = vunpack.c.l.b16 %v894
      %v1184 = vunpack.c.h.b16 %v894
      %v1185 = vunpack.c.l.b16 %v895
      %v1186 = vunpack.c.h.b16 %v895
      %v1187 = vunpack.c.l.b16 %v896
      %v1188 = vunpack.c.h.b16 %v896
      %v1189 = vunpack.c.l.b16 %v897
      %v1190 = vunpack.c.h.b16 %v897
      %v1191 = vunpack.c.l.b16 %v898
      %v1192 = vunpack.c.h.b16 %v898
      %v1193 = vunpack.c.l.b16 %v899
      %v1194 = vunpack.c.h.b16 %v899
      %v1195 = vunpack.c.l.b16 %v900
      %v1196 = vunpack.c.h.b16 %v900
      %v1197 = vunpack.c.l.b16 %v901
      %v1198 = vunpack.c.h.b16 %v901
      %v1199 = vunpack.c.l.b16 %v902
      %v1200 = vunpack.c.h.b16 %v902
      %v1201 = vunpack.c.l.b16 %v903
      %v1202 = vunpack.c.h.b16 %v903
      %v1203 = vunpack.c.l.b16 %v904
      %v1204 = vunpack.c.h.b16 %v904
      %v1205 = vunpack.c.l.b16 %v905
      %v1206 = vunpack.c.h.b16 %v905
      %v1207 = vunpack.c.l.b16 %v906
      %v1208 = vunpack.c.h.b16 %v906
      %v1209 = vunpack.c.l.b16 %v907
      %v1210 = vunpack.c.h.b16 %v907
      %v1211 = vunpack.c.l.b16 %v908
      %v1212 = vunpack.c.h.b16 %v908
      %v1213 = vunpack.c.l.b16 %v909
      %v1214 = vunpack.c.h.b16 %v909
      %v1215 = vunpack.c.l.b16 %v910
      %v1216 = vunpack.c.h.b16 %v910
      %v1217 = vunpack.c.l.b16 %v911
      %v1218 = vunpack.c.h.b16 %v911
      %v1219 = vunpack.c.l.b16 %v912
      %v1220 = vunpack.c.h.b16 %v912
      %v1221 = vunpack.c.l.b16 %v913
      %v1222 = vunpack.c.h.b16 %v913
      %v1223 = vunpack.c.l.b16 %v914
      %v1224 = vunpack.c.h.b16 %v914
      %v1225 = vunpack.c.l.b16 %v915
      %v1226 = vunpack.c.h.b16 %v915
      %v1227 = vunpack.c.l.b16 %v916
      %v1228 = vunpack.c.h.b16 %v916
      %v1229 = vunpack.c.l.b16 %v917
      %v1230 = vunpack.c.h.b16 %v917
      %v1231 = vunpack.c.l.b16 %v918
      %v1232 = vunpack.c.h.b16 %v918
      %v1233 = vunpack.c.l.b16 %v919
      %v1234 = vunpack.c.h.b16 %v919
      %v1235 = vunpack.c.l.b16 %v920
      %v1236 = vunpack.c.h.b16 %v920
      %v1237 = vunpack.c.l.b16 %v921
      %v1238 = vunpack.c.h.b16 %v921
      %v1239 = vunpack.c.l.b16 %v922
      %v1240 = vunpack.c.h.b16 %v922
      %v1241 = vunpack.c.l.b16 %v923
      %v1242 = vunpack.c.h.b16 %v923
      %v1243 = vunpack.c.l.b16 %v924
      %v1244 = vunpack.c.h.b16 %v924
      %v1245 = vunpack.c.l.b16 %v925
      %v1246 = vunpack.c.h.b16 %v925
      %v1247 = vunpack.c.l.b16 %v926
      %v1248 = vunpack.c.h.b16 %v926
      %v1249 = vunpack.c.l.b16 %v927
      %v1250 = vunpack.c.h.b16 %v927
      %v1251 = vunpack.c.l.b16 %v928
      %v1252 = vunpack.c.h.b16 %v928
      %v1253 = vunpack.c.l.b16 %v929
      %v1254 = vunpack.c.h.b16 %v929
      %v1255 = vunpack.c.l.b16 %v930
      %v1256 = vunpack.c.h.b16 %v930
      %v1257 = vunpack.c.l.b16 %v931
      %v1258 = vunpack.c.h.b16 %v931
      %v1259 = vunpack.c.l.b16 %v932
      %v1260 = vunpack.c.h.b16 %v932
      %v1261 = vunpack.c.l.b16 %v933
      %v1262 = vunpack.c.h.b16 %v933
      %v1263 = vunpack.c.l.b16 %v934
      %v1264 = vunpack.c.h.b16 %v934
      %v1265 = vunpack.c.l.b16 %v935
      %v1266 = vunpack.c.h.b16 %v935
      %v1267 = vunpack.c.l.b16 %v936
      %v1268 = vunpack.c.h.b16 %v936
      %v1269 = vunpack.c.l.b16 %v937
      %v1270 = vunpack.c.h.b16 %v937
      %v1271 = vunpack.c.l.b16 %v938
      %v1272 = vunpack.c.h.b16 %v938
      %v1273 = vunpack.c.l.b16 %v939
      %v1274 = vunpack.c.h.b16 %v939
      %v1275 = vunpack.c.l.b16 %v940
      %v1276 = vunpack.c.h.b16 %v940
      %v1277 = vunpack.c.l.b16 %v941
      %v1278 = vunpack.c.h.b16 %v941
      %v1279 = vunpack.c.l.b16 %v942
      %v1280 = vunpack.c.h.b16 %v942
      %v1281 = vunpack.c.l.b16 %v943
      %v1282 = vunpack.c.h.b16 %v943
      %v1283 = vunpack.c.l.b16 %v944
      %v1284 = vunpack.c.h.b16 %v944
      %v1285 = vunpack.c.l.b16 %v945
      %v1286 = vunpack.c.h.b16 %v945
      %v1287 = vunpack.c.l.b16 %v946
      %v1288 = vunpack.c.h.b16 %v946
      %v1289 = vunpack.c.l.b16 %v947
      %v1290 = vunpack.c.h.b16 %v947
      %v1291 = vunpack.c.l.b16 %v948
      %v1292 = vunpack.c.h.b16 %v948
      %v1293 = vunpack.c.l.b16 %v949
      %v1294 = vunpack.c.h.b16 %v949
      %v1295 = vunpack.c.l.b16 %v950
      %v1296 = vunpack.c.h.b16 %v950
      %v1297 = vunpack.c.l.b16 %v951
      %v1298 = vunpack.c.h.b16 %v951
      %v1299 = vunpack.c.l.b16 %v952
      %v1300 = vunpack.c.h.b16 %v952
      %v1301 = vunpack.c.l.b16 %v953
      %v1302 = vunpack.c.h.b16 %v953
      %v1303 = vunpack.c.l.b16 %v954
      %v1304 = vunpack.c.h.b16 %v954
      %v1305 = vunpack.c.l.b16 %v955
      %v1306 = vunpack.c.h.b16 %v955
      %v1307 = vunpack.c.l.b16 %v956
      %v1308 = vunpack.c.h.b16 %v956
      %v1309 = vunpack.c.l.b16 %v957
      %v1310 = vunpack.c.h.b16 %v957
      %v1311 = vunpack.c.l.b16 %v958
      %v1312 = vunpack.c.h.b16 %v958
      %v1313 = vunpack.c.l.b16 %v959
      %v1314 = vunpack.c.h.b16 %v959
      %v1315 = vunpack.c.l.b16 %v960
      %v1316 = vunpack.c.h.b16 %v960
      %v1317 = vunpack.c.l.b16 %v961
      %v1318 = vunpack.c.h.b16 %v961
      %v1319 = vunpack.c.l.b16 %v962
      %v1320 = vunpack.c.h.b16 %v962
      %v1321 = vunpack.c.l.b16 %v963
      %v1322 = vunpack.c.h.b16 %v963
      %v1323 = vunpack.c.l.b16 %v964
      %v1324 = vunpack.c.h.b16 %v964
      %v1325 = vunpack.c.l.b16 %v965
      %v1326 = vunpack.c.h.b16 %v965
      %v1327 = vunpack.c.l.b16 %v966
      %v1328 = vunpack.c.h.b16 %v966
      %v1329 = vunpack.c.l.b16 %v967
      %v1330 = vunpack.c.h.b16 %v967
      %v1331 = vunpack.c.l.b16 %v968
      %v1332 = vunpack.c.h.b16 %v968
      %v1333 = vunpack.c.l.b16 %v969
      %v1334 = vunpack.c.h.b16 %v969
      %v1335 = vunpack.c.l.b16 %v970
      %v1336 = vunpack.c.h.b16 %v970
      %v1337 = vunpack.c.l.b16 %v971
      %v1338 = vunpack.c.h.b16 %v971
      %v1339 = vunpack.c.l.b16 %v972
      %v1340 = vunpack.c.h.b16 %v972
      %v1341 = vunpack.c.l.b16 %v973
      %v1342 = vunpack.c.h.b16 %v973
      %v1343 = vunpack.c.l.b16 %v974
      %v1344 = vunpack.c.h.b16 %v974
      %v1345 = vunpack.c.l.b16 %v975
      %v1346 = vunpack.c.h.b16 %v975
      %v1347 = vunpack.c.l.b16 %v976
      %v1348 = vunpack.c.h.b16 %v976
      %v1349 = vunpack.c.l.b16 %v977
      %v1350 = vunpack.c.h.b16 %v977
      %v1351 = vunpack.c.l.b16 %v978
      %v1352 = vunpack.c.h.b16 %v978
      %v1353 = vunpack.c.l.b16 %v979
      %v1354 = vunpack.c.h.b16 %v979
      %v1355 = vunpack.c.l.b16 %v980
      %v1356 = vunpack.c.h.b16 %v980
      %v1357 = vunpack.c.l.b16 %v981
      %v1358 = vunpack.c.h.b16 %v981
      %v1359 = vunpack.c.l.b16 %v982
      %v1360 = vunpack.c.h.b16 %v982
      %v1361 = vunpack.c.l.b16 %v983
      %v1362 = vunpack.c.h.b16 %v983
      %v1363 = vunpack.c.l.b16 %v984
      %v1364 = vunpack.c.h.b16 %v984
      %v1365 = vunpack.c.l.b16 %v985
      %v1366 = vunpack.c.h.b16 %v985
      %v1367 = vunpack.c.l.b16 %v986
      %v1368 = vunpack.c.h.b16 %v986
      %v1369 = vunpack.c.l.b16 %v987
      %v1370 = vunpack.c.h.b16 %v987
      %v1371 = vunpack.c.l.b16 %v988
      %v1372 = vunpack.c.h.b16 %v988
      %v1373 = vunpack.c.l.b16 %v989
      %v1374 = vunpack.c.h.b16 %v989
      %v1375 = vunpack.c.l.b16 %v990
      %v1376 = vunpack.c.h.b16 %v990
      %v1377 = vunpack.c.l.b16 %v991
      %v1378 = vunpack.c.h.b16 %v991
      %v1379 = vunpack.c.l.b16 %v992
      %v1380 = vunpack.c.h.b16 %v992
      %v1381 = vunpack.c.l.b16 %v993
      %v1382 = vunpack.c.h.b16 %v993
      %v1383 = vunpack.c.l.b16 %v994
      %v1384 = vunpack.c.h.b16 %v994
      %v1385 = vunpack.c.l.b16 %v995
      %v1386 = vunpack.c.h.b16 %v995
      %v1387 = vunpack.c.l.b16 %v996
      %v1388 = vunpack.c.h.b16 %v996
      %v1389 = vunpack.c.l.b16 %v997
      %v1390 = vunpack.c.h.b16 %v997
      %v1391 = vunpack.c.l.b16 %v998
      %v1392 = vunpack.c.h.b16 %v998
      %v1393 = vunpack.c.l.b16 %v999
      %v1394 = vunpack.c.h.b16 %v999
      %v1395 = vunpack.c.l.b16 %v1000
      %v1396 = vunpack.c.h.b16 %v1000
      %v1397 = vunpack.c.l.b16 %v1001
      %v1398 = vunpack.c.h.b16 %v1001
      %v1399 = vunpack.c.l.b16 %v1002
      %v1400 = vunpack.c.h.b16 %v1002
      %v1401 = vunpack.c.l.b16 %v1003
      %v1402 = vunpack.c.h.b16 %v1003
      %v1403 = vunpack.c.l.b16 %v1004
      %v1404 = vunpack.c.h.b16 %v1004
      %v1405 = vunpack.c.l.b16 %v1005
      %v1406 = vunpack.c.h.b16 %v1005
      %v1407 = vunpack.c.l.b16 %v1006
      %v1408 = vunpack.c.h.b16 %v1006
      %v1409 = vunpack.c.l.b16 %v1007
      %v1410 = vunpack.c.h.b16 %v1007
      %v1411 = vunpack.c.l.b16 %v1008
      %v1412 = vunpack.c.h.b16 %v1008
      %v1413 = vunpack.c.l.b16 %v1009
      %v1414 = vunpack.c.h.b16 %v1009
      %v1415 = vunpack.c.l.b16 %v1010
      %v1416 = vunpack.c.h.b16 %v1010
      %v1417 = vpack.c.b16 %v1165, %v1161
      %v1418 = vpack.c.b16 %v1166, %v1162
      %v1419 = vpack.c.b16 %v1167, %v1163
      %v1420 = vpack.c.b16 %v1168, %v1164
      %v1421 = vpack.c.b16 %v1173, %v1169
      %v1422 = vpack.c.b16 %v1174, %v1170
      %v1423 = vpack.c.b16 %v1175, %v1171
      %v1424 = vpack.c.b16 %v1176, %v1172
      %v1425 = vpack.c.b16 %v1181, %v1177
      %v1426 = vpack.c.b16 %v1182, %v1178
      %v1427 = vpack.c.b16 %v1183, %v1179
      %v1428 = vpack.c.b16 %v1184, %v1180
      %v1429 = vpack.c.b16 %v1189, %v1185
      %v1430 = vpack.c.b16 %v1190, %v1186
      %v1431 = vpack.c.b16 %v1191, %v1187
      %v1432 = vpack.c.b16 %v1192, %v1188
      %v1433 = vpack.c.b16 %v1197, %v1193
      %v1434 = vpack.c.b16 %v1198, %v1194
      %v1435 = vpack.c.b16 %v1199, %v1195
      %v1436 = vpack.c.b16 %v1200, %v1196
      %v1437 = vpack.c.b16 %v1205, %v1201
      %v1438 = vpack.c.b16 %v1206, %v1202
      %v1439 = vpack.c.b16 %v1207, %v1203
      %v1440 = vpack.c.b16 %v1208, %v1204
      %v1441 = vpack.c.b16 %v1213, %v1209
      %v1442 = vpack.c.b16 %v1214, %v1210
      %v1443 = vpack.c.b16 %v1215, %v1211
      %v1444 = vpack.c.b16 %v1216, %v1212
      %v1445 = vpack.c.b16 %v1221, %v1217
      %v1446 = vpack.c.b16 %v1222, %v1218
      %v1447 = vpack.c.b16 %v1223, %v1219
      %v1448 = vpack.c.b16 %v1224, %v1220
      %v1449 = vpack.c.b16 %v1229, %v1225
      %v1450 = vpack.c.b16 %v1230, %v1226
      %v1451 = vpack.c.b16 %v1231, %v1227
      %v1452 = vpack.c.b16 %v1232, %v1228
      %v1453 = vpack.c.b16 %v1237, %v1233
      %v1454 = vpack.c.b16 %v1238, %v1234
      %v1455 = vpack.c.b16 %v1239, %v1235
      %v1456 = vpack.c.b16 %v1240, %v1236
      %v1457 = vpack.c.b16 %v1245, %v1241
      %v1458 = vpack.c.b16 %v1246, %v1242
      %v1459 = vpack.c.b16 %v1247, %v1243
      %v1460 = vpack.c.b16 %v1248, %v1244
      %v1461 = vpack.c.b16 %v1253, %v1249
      %v1462 = vpack.c.b16 %v1254, %v1250
      %v1463 = vpack.c.b16 %v1255, %v1251
      %v1464 = vpack.c.b16 %v1256, %v1252
      %v1465 = vpack.c.b16 %v1261, %v1257
      %v1466 = vpack.c.b16 %v1262, %v1258
      %v1467 = vpack.c.b16 %v1263, %v1259
      %v1468 = vpack.c.b16 %v1264, %v1260
      %v1469 = vpack.c.b16 %v1269, %v1265
      %v1470 = vpack.c.b16 %v1270, %v1266
      %v1471 = vpack.c.b16 %v1271, %v1267
      %v1472 = vpack.c.b16 %v1272, %v1268
      %v1473 = vpack.c.b16 %v1277, %v1273
      %v1474 = vpack.c.b16 %v1278, %v1274
      %v1475 = vpack.c.b16 %v1279, %v1275
      %v1476 = vpack.c.b16 %v1280, %v1276
      %v1477 = vpack.c.b16 %v1285, %v1281
      %v1478 = vpack.c.b16 %v1286, %v1282
      %v1479 = vpack.c.b16 %v1287, %v1283
      %v1480 = vpack.c.b16 %v1288, %v1284
      %v1481 = vpack.c.b16 %v1293, %v1289
      %v1482 = vpack.c.b16 %v1294, %v1290
      %v1483 = vpack.c.b16 %v1295, %v1291
      %v1484 = vpack.c.b16 %v1296, %v1292
      %v1485 = vpack.c.b16 %v1301, %v1297
      %v1486 = vpack.c.b16 %v1302, %v1298
      %v1487 = vpack.c.b16 %v1303, %v1299
      %v1488 = vpack.c.b16 %v1304, %v1300
      %v1489 = vpack.c.b16 %v1309, %v1305
      %v1490 = vpack.c.b16 %v1310, %v1306
      %v1491 = vpack.c.b16 %v1311, %v1307
      %v1492 = vpack.c.b16 %v1312, %v1308
      %v1493 = vpack.c.b16 %v1317, %v1313
      %v1494 = vpack.c.b16 %v1318, %v1314
      %v1495 = vpack.c.b16 %v1319, %v1315
      %v1496 = vpack.c.b16 %v1320, %v1316
      %v1497 = vpack.c.b16 %v1325, %v1321
      %v1498 = vpack.c.b16 %v1326, %v1322
      %v1499 = vpack.c.b16 %v1327, %v1323
      %v1500 = vpack.c.b16 %v1328, %v1324
      %v1501 = vpack.c.b16 %v1333, %v1329
      %v1502 = vpack.c.b16 %v1334, %v1330
      %v1503 = vpack.c.b16 %v1335, %v1331
      %v1504 = vpack.c.b16 %v1336, %v1332
      %v1505 = vpack.c.b16 %v1341, %v1337
      %v1506 = vpack.c.b16 %v1342, %v1338
      %v1507 = vpack.c.b16 %v1343, %v1339
      %v1508 = vpack.c.b16 %v1344, %v1340
      %v1509 = vpack.c.b16 %v1349, %v1345
      %v1510 = vpack.c.b16 %v1350, %v1346
      %v1511 = vpack.c.b16 %v1351, %v1347
      %v1512 = vpack.c.b16 %v1352, %v1348
      %v1513 = vpack.c.b16 %v1357, %v1353
      %v1514 = vpack.c.b16 %v1358, %v1354
      %v1515 = vpack.c.b16 %v1359, %v1355
      %v1516 = vpack.c.b16 %v1360, %v1356
      %v1517 = vpack.c.b16 %v1365, %v1361
      %v1518 = vpack.c.b16 %v1366, %v1362
      %v1519 = vpack.c.b16 %v1367, %v1363
      %v1520 = vpack.c.b16 %v1368, %v1364
      %v1521 = vpack.c.b16 %v1373, %v1369
      %v1522 = vpack.c.b16 %v1374, %v1370
      %v1523 = vpack.c.b16 %v1375, %v1371
      %v1524 = vpack.c.b16 %v1376, %v1372
      %v1525 = vpack.c.b16 %v1381, %v1377
      %v1526 = vpack.c.b16 %v1382, %v1378
      %v1527 = vpack.c.b16 %v1383, %v1379
      %v1528 = vpack.c.b16 %v1384, %v1380
      %v1529 = vpack.c.b16 %v1389, %v1385
      %v1530 = vpack.c.b16 %v1390, %v1386
      %v1531 = vpack.c.b16 %v1391, %v1387
      %v1532 = vpack.c.b16 %v1392, %v1388
      %v1533 = vpack.c.b16 %v1397, %v1393
      %v1534 = vpack.c.b16 %v1398, %v1394
      %v1535 = vpack.c.b16 %v1399, %v1395
      %v1536 = vpack.c.b16 %v1400, %v1396
      %v1537 = vpack.c.b16 %v1405, %v1401
      %v1538 = vpack.c.b16 %v1406, %v1402
      %v1539 = vpack.c.b16 %v1407, %v1403
      %v1540 = vpack.c.b16 %v1408, %v1404
      %v1541 = vpack.c.b16 %v1413, %v1409
      %v1542 = vpack.c.b16 %v1414, %v1410
      %v1543 = vpack.c.b16 %v1415, %v1411
      %v1544 = vpack.c.b16 %v1416, %v1412
      %1673 = vmatprep.subr.bf16.mxu0 %v1446
      %1674 = vmatpush1.bf16.msra.mxu0 %v1445
      %1675 = vmatprep.subr.bf16.mxu0 %v1442
      %1676 = vmatpush1.bf16.msra.mxu0 %v1441
      %1677 = vmatprep.subr.bf16.mxu0 %v1438
      %1678 = vmatpush1.bf16.msra.mxu0 %v1437
      %1679 = vmatprep.subr.bf16.mxu0 %v1434
      %1680 = vmatpush1.bf16.msra.mxu0 %v1433
      %1681 = vmatprep.subr.bf16.mxu0 %v1430
      %1682 = vmatpush1.bf16.msra.mxu0 %v1429
      %1683 = vmatprep.subr.bf16.mxu0 %v1426
      %1684 = vmatpush1.bf16.msra.mxu0 %v1425
      %1685 = vmatprep.subr.bf16.mxu0 %v1422
      %1686 = vmatpush1.bf16.msra.mxu0 %v1421
      %1687 = vmatprep.subr.bf16.mxu0 %v1418
      %1688 = vmatpush1.bf16.msra.mxu0 %v1417
      %1689 = vmatprep.subr.bf16.mxu0 %v1478
      %1690 = vmatpush2.bf16.msra.mxu0 %v1477
      %1691 = vmatprep.subr.bf16.mxu0 %v1474
      %1692 = vmatpush2.bf16.msra.mxu0 %v1473
      %1693 = vmatprep.subr.bf16.mxu0 %v1470
      %1694 = vmatpush2.bf16.msra.mxu0 %v1469
      %1695 = vmatprep.subr.bf16.mxu0 %v1466
      %1696 = vmatpush2.bf16.msra.mxu0 %v1465
      %1697 = vmatprep.subr.bf16.mxu0 %v1462
      %1698 = vmatpush2.bf16.msra.mxu0 %v1461
      %1699 = vmatprep.subr.bf16.mxu0 %v1458
      %1700 = vmatpush2.bf16.msra.mxu0 %v1457
      %1701 = vmatprep.subr.bf16.mxu0 %v1454
      %1702 = vmatpush2.bf16.msra.mxu0 %v1453
      %1703 = vmatprep.subr.bf16.mxu0 %v1450
      %1704 = vmatpush2.bf16.msra.mxu0 %v1449
      %1705 = vmatprep.mubr.bf16.mxu0 %v852
      %1706 = vmatmul.mubr.bf16.gmra.mxu0 %v851
      %v1707 = vpop.f32.mrf.mxu0
      %v1708 = vadd.f32 %v1016, %v1707
      %v1709 = vpop.f32.mrf.mxu0
      %v1710 = vadd.f32 %v1020, %v1709
      %v1711 = vpop.f32.mrf.mxu0
      %v1712 = vadd.f32 %v1016, %v1711
      %v1713 = vpop.f32.mrf.mxu0
      %v1714 = vadd.f32 %v1020, %v1713
      %1715 = vmatprep.mubr.bf16.mxu0 %v856
      %1716 = vmatmul.mubr.bf16.gmra.mxu0 %v855
      %v1717 = vpop.f32.mrf.mxu0
      %v1718 = vadd.f32 %v1016, %v1717
      %v1719 = vpop.f32.mrf.mxu0
      %v1720 = vadd.f32 %v1020, %v1719
      %v1721 = vpop.f32.mrf.mxu0
      %v1722 = vadd.f32 %v1016, %v1721
      %v1723 = vpop.f32.mrf.mxu0
      %v1724 = vadd.f32 %v1020, %v1723
      %1725 = vmatprep.mubr.bf16.mxu0 %v860
      %1726 = vmatmul.mubr.bf16.gmra.mxu0 %v859
      %v1727 = vpop.f32.mrf.mxu0
      %v1728 = vadd.f32 %v1016, %v1727
      %v1729 = vpop.f32.mrf.mxu0
      %v1730 = vadd.f32 %v1020, %v1729
      %v1731 = vpop.f32.mrf.mxu0
      %v1732 = vadd.f32 %v1016, %v1731
      %v1733 = vpop.f32.mrf.mxu0
      %v1734 = vadd.f32 %v1020, %v1733
      %1735 = vmatprep.mubr.bf16.mxu0 %v864
      %1736 = vmatmul.mubr.bf16.gmra.mxu0 %v863
      %v1737 = vpop.f32.mrf.mxu0
      %v1738 = vadd.f32 %v1016, %v1737
      %v1739 = vpop.f32.mrf.mxu0
      %v1740 = vadd.f32 %v1020, %v1739
      %v1741 = vpop.f32.mrf.mxu0
      %v1742 = vadd.f32 %v1016, %v1741
      %v1743 = vpop.f32.mrf.mxu0
      %v1744 = vadd.f32 %v1020, %v1743
      %1745 = vmatprep.mubr.bf16.mxu0 %v868
      %1746 = vmatmul.mubr.bf16.gmra.mxu0 %v867
      %v1747 = vpop.f32.mrf.mxu0
      %v1748 = vadd.f32 %v1016, %v1747
      %v1749 = vpop.f32.mrf.mxu0
      %v1750 = vadd.f32 %v1020, %v1749
      %v1751 = vpop.f32.mrf.mxu0
      %v1752 = vadd.f32 %v1016, %v1751
      %v1753 = vpop.f32.mrf.mxu0
      %v1754 = vadd.f32 %v1020, %v1753
      %1755 = vmatprep.mubr.bf16.mxu0 %v872
      %1756 = vmatmul.mubr.bf16.gmra.mxu0 %v871
      %v1757 = vpop.f32.mrf.mxu0
      %v1758 = vadd.f32 %v1016, %v1757
      %v1759 = vpop.f32.mrf.mxu0
      %v1760 = vadd.f32 %v1020, %v1759
      %v1761 = vpop.f32.mrf.mxu0
      %v1762 = vadd.f32 %v1016, %v1761
      %v1763 = vpop.f32.mrf.mxu0
      %v1764 = vadd.f32 %v1020, %v1763
      %1765 = vmatprep.mubr.bf16.mxu0 %v876
      %1766 = vmatmul.mubr.bf16.gmra.mxu0 %v875
      %v1767 = vpop.f32.mrf.mxu0
      %v1768 = vadd.f32 %v1016, %v1767
      %v1769 = vpop.f32.mrf.mxu0
      %v1770 = vadd.f32 %v1020, %v1769
      %v1771 = vpop.f32.mrf.mxu0
      %v1772 = vadd.f32 %v1016, %v1771
      %v1773 = vpop.f32.mrf.mxu0
      %v1774 = vadd.f32 %v1020, %v1773
      %1775 = vmatprep.mubr.bf16.mxu0 %v880
      %1776 = vmatmul.mubr.bf16.gmra.mxu0 %v879
      %v1777 = vpop.f32.mrf.mxu0
      %v1778 = vadd.f32 %v1016, %v1777
      %v1779 = vpop.f32.mrf.mxu0
      %v1780 = vadd.f32 %v1020, %v1779
      %v1781 = vpop.f32.mrf.mxu0
      %v1782 = vadd.f32 %v1016, %v1781
      %v1783 = vpop.f32.mrf.mxu0
      %v1784 = vadd.f32 %v1020, %v1783
      %1785 = vdwg.mxu0
      %1786 = vmatprep.subr.bf16.mxu0 %v1510
      %1787 = vmatpush1.bf16.msra.mxu0 %v1509
      %1788 = vmatprep.subr.bf16.mxu0 %v1506
      %1789 = vmatpush1.bf16.msra.mxu0 %v1505
      %1790 = vmatprep.subr.bf16.mxu0 %v1502
      %1791 = vmatpush1.bf16.msra.mxu0 %v1501
      %1792 = vmatprep.subr.bf16.mxu0 %v1498
      %1793 = vmatpush1.bf16.msra.mxu0 %v1497
      %1794 = vmatprep.subr.bf16.mxu0 %v1494
      %1795 = vmatpush1.bf16.msra.mxu0 %v1493
      %1796 = vmatprep.subr.bf16.mxu0 %v1490
      %1797 = vmatpush1.bf16.msra.mxu0 %v1489
      %1798 = vmatprep.subr.bf16.mxu0 %v1486
      %1799 = vmatpush1.bf16.msra.mxu0 %v1485
      %1800 = vmatprep.subr.bf16.mxu0 %v1482
      %1801 = vmatpush1.bf16.msra.mxu0 %v1481
      %1802 = vmatprep.subr.bf16.mxu0 %v1542
      %1803 = vmatpush2.bf16.msra.mxu0 %v1541
      %1804 = vmatprep.subr.bf16.mxu0 %v1538
      %1805 = vmatpush2.bf16.msra.mxu0 %v1537
      %1806 = vmatprep.subr.bf16.mxu0 %v1534
      %1807 = vmatpush2.bf16.msra.mxu0 %v1533
      %1808 = vmatprep.subr.bf16.mxu0 %v1530
      %1809 = vmatpush2.bf16.msra.mxu0 %v1529
      %1810 = vmatprep.subr.bf16.mxu0 %v1526
      %1811 = vmatpush2.bf16.msra.mxu0 %v1525
      %1812 = vmatprep.subr.bf16.mxu0 %v1522
      %1813 = vmatpush2.bf16.msra.mxu0 %v1521
      %1814 = vmatprep.subr.bf16.mxu0 %v1518
      %1815 = vmatpush2.bf16.msra.mxu0 %v1517
      %1816 = vmatprep.subr.bf16.mxu0 %v1514
      %1817 = vmatpush2.bf16.msra.mxu0 %v1513
      %1818 = vmatprep.mubr.bf16.mxu0 %v854
      %1819 = vmatmul.mubr.bf16.gmra.mxu0 %v853
      %v1820 = vpop.f32.mrf.mxu0
      %v1821 = vadd.f32 %v1708, %v1820
      %v1822 = vpop.f32.mrf.mxu0
      %v1823 = vadd.f32 %v1710, %v1822
      %v1824 = vpop.f32.mrf.mxu0
      %v1825 = vadd.f32 %v1712, %v1824
      %v1826 = vpop.f32.mrf.mxu0
      %v1827 = vadd.f32 %v1714, %v1826
      %1828 = vmatprep.mubr.bf16.mxu0 %v858
      %1829 = vmatmul.mubr.bf16.gmra.mxu0 %v857
      %v1830 = vpop.f32.mrf.mxu0
      %v1831 = vadd.f32 %v1718, %v1830
      %v1832 = vpop.f32.mrf.mxu0
      %v1833 = vadd.f32 %v1720, %v1832
      %v1834 = vpop.f32.mrf.mxu0
      %v1835 = vadd.f32 %v1722, %v1834
      %v1836 = vpop.f32.mrf.mxu0
      %v1837 = vadd.f32 %v1724, %v1836
      %1838 = vmatprep.mubr.bf16.mxu0 %v862
      %1839 = vmatmul.mubr.bf16.gmra.mxu0 %v861
      %v1840 = vpop.f32.mrf.mxu0
      %v1841 = vadd.f32 %v1728, %v1840
      %v1842 = vpop.f32.mrf.mxu0
      %v1843 = vadd.f32 %v1730, %v1842
      %v1844 = vpop.f32.mrf.mxu0
      %v1845 = vadd.f32 %v1732, %v1844
      %v1846 = vpop.f32.mrf.mxu0
      %v1847 = vadd.f32 %v1734, %v1846
      %1848 = vmatprep.mubr.bf16.mxu0 %v866
      %1849 = vmatmul.mubr.bf16.gmra.mxu0 %v865
      %v1850 = vpop.f32.mrf.mxu0
      %v1851 = vadd.f32 %v1738, %v1850
      %v1852 = vpop.f32.mrf.mxu0
      %v1853 = vadd.f32 %v1740, %v1852
      %v1854 = vpop.f32.mrf.mxu0
      %v1855 = vadd.f32 %v1742, %v1854
      %v1856 = vpop.f32.mrf.mxu0
      %v1857 = vadd.f32 %v1744, %v1856
      %1858 = vmatprep.mubr.bf16.mxu0 %v870
      %1859 = vmatmul.mubr.bf16.gmra.mxu0 %v869
      %v1860 = vpop.f32.mrf.mxu0
      %v1861 = vadd.f32 %v1748, %v1860
      %v1862 = vpop.f32.mrf.mxu0
      %v1863 = vadd.f32 %v1750, %v1862
      %v1864 = vpop.f32.mrf.mxu0
      %v1865 = vadd.f32 %v1752, %v1864
      %v1866 = vpop.f32.mrf.mxu0
      %v1867 = vadd.f32 %v1754, %v1866
      %1868 = vmatprep.mubr.bf16.mxu0 %v874
      %1869 = vmatmul.mubr.bf16.gmra.mxu0 %v873
      %v1870 = vpop.f32.mrf.mxu0
      %v1871 = vadd.f32 %v1758, %v1870
      %v1872 = vpop.f32.mrf.mxu0
      %v1873 = vadd.f32 %v1760, %v1872
      %v1874 = vpop.f32.mrf.mxu0
      %v1875 = vadd.f32 %v1762, %v1874
      %v1876 = vpop.f32.mrf.mxu0
      %v1877 = vadd.f32 %v1764, %v1876
      %1878 = vmatprep.mubr.bf16.mxu0 %v878
      %1879 = vmatmul.mubr.bf16.gmra.mxu0 %v877
      %v1880 = vpop.f32.mrf.mxu0
      %v1881 = vadd.f32 %v1768, %v1880
      %v1882 = vpop.f32.mrf.mxu0
      %v1883 = vadd.f32 %v1770, %v1882
      %v1884 = vpop.f32.mrf.mxu0
      %v1885 = vadd.f32 %v1772, %v1884
      %v1886 = vpop.f32.mrf.mxu0
      %v1887 = vadd.f32 %v1774, %v1886
      %1888 = vmatprep.mubr.bf16.mxu0 %v882
      %1889 = vmatmul.mubr.bf16.gmra.mxu0 %v881
      %v1890 = vpop.f32.mrf.mxu0
      %v1891 = vadd.f32 %v1778, %v1890
      %v1892 = vpop.f32.mrf.mxu0
      %v1893 = vadd.f32 %v1780, %v1892
      %v1894 = vpop.f32.mrf.mxu0
      %v1895 = vadd.f32 %v1782, %v1894
      %v1896 = vpop.f32.mrf.mxu0
      %v1897 = vadd.f32 %v1784, %v1896
      %1898 = vdwg.mxu0
      %1899 = vmatprep.subr.bf16.mxu0 %v1448
      %1900 = vmatpush1.bf16.msra.mxu0 %v1447
      %1901 = vmatprep.subr.bf16.mxu0 %v1444
      %1902 = vmatpush1.bf16.msra.mxu0 %v1443
      %1903 = vmatprep.subr.bf16.mxu0 %v1440
      %1904 = vmatpush1.bf16.msra.mxu0 %v1439
      %1905 = vmatprep.subr.bf16.mxu0 %v1436
      %1906 = vmatpush1.bf16.msra.mxu0 %v1435
      %1907 = vmatprep.subr.bf16.mxu0 %v1432
      %1908 = vmatpush1.bf16.msra.mxu0 %v1431
      %1909 = vmatprep.subr.bf16.mxu0 %v1428
      %1910 = vmatpush1.bf16.msra.mxu0 %v1427
      %1911 = vmatprep.subr.bf16.mxu0 %v1424
      %1912 = vmatpush1.bf16.msra.mxu0 %v1423
      %1913 = vmatprep.subr.bf16.mxu0 %v1420
      %1914 = vmatpush1.bf16.msra.mxu0 %v1419
      %1915 = vmatprep.subr.bf16.mxu0 %v1480
      %1916 = vmatpush2.bf16.msra.mxu0 %v1479
      %1917 = vmatprep.subr.bf16.mxu0 %v1476
      %1918 = vmatpush2.bf16.msra.mxu0 %v1475
      %1919 = vmatprep.subr.bf16.mxu0 %v1472
      %1920 = vmatpush2.bf16.msra.mxu0 %v1471
      %1921 = vmatprep.subr.bf16.mxu0 %v1468
      %1922 = vmatpush2.bf16.msra.mxu0 %v1467
      %1923 = vmatprep.subr.bf16.mxu0 %v1464
      %1924 = vmatpush2.bf16.msra.mxu0 %v1463
      %1925 = vmatprep.subr.bf16.mxu0 %v1460
      %1926 = vmatpush2.bf16.msra.mxu0 %v1459
      %1927 = vmatprep.subr.bf16.mxu0 %v1456
      %1928 = vmatpush2.bf16.msra.mxu0 %v1455
      %1929 = vmatprep.subr.bf16.mxu0 %v1452
      %1930 = vmatpush2.bf16.msra.mxu0 %v1451
      %1931 = vmatprep.mubr.bf16.mxu0 %v852
      %1932 = vmatmul.mubr.bf16.gmra.mxu0 %v851
      %v1933 = vpop.f32.mrf.mxu0
      %v1934 = vadd.f32 %v1024, %v1933
      %v1935 = vpop.f32.mrf.mxu0
      %v1936 = vadd.f32 %v1028, %v1935
      %v1937 = vpop.f32.mrf.mxu0
      %v1938 = vadd.f32 %v1024, %v1937
      %v1939 = vpop.f32.mrf.mxu0
      %v1940 = vadd.f32 %v1028, %v1939
      %1941 = vmatprep.mubr.bf16.mxu0 %v856
      %1942 = vmatmul.mubr.bf16.gmra.mxu0 %v855
      %v1943 = vpop.f32.mrf.mxu0
      %v1944 = vadd.f32 %v1024, %v1943
      %v1945 = vpop.f32.mrf.mxu0
      %v1946 = vadd.f32 %v1028, %v1945
      %v1947 = vpop.f32.mrf.mxu0
      %v1948 = vadd.f32 %v1024, %v1947
      %v1949 = vpop.f32.mrf.mxu0
      %v1950 = vadd.f32 %v1028, %v1949
      %1951 = vmatprep.mubr.bf16.mxu0 %v860
      %1952 = vmatmul.mubr.bf16.gmra.mxu0 %v859
      %v1953 = vpop.f32.mrf.mxu0
      %v1954 = vadd.f32 %v1024, %v1953
      %v1955 = vpop.f32.mrf.mxu0
      %v1956 = vadd.f32 %v1028, %v1955
      %v1957 = vpop.f32.mrf.mxu0
      %v1958 = vadd.f32 %v1024, %v1957
      %v1959 = vpop.f32.mrf.mxu0
      %v1960 = vadd.f32 %v1028, %v1959
      %1961 = vmatprep.mubr.bf16.mxu0 %v864
      %1962 = vmatmul.mubr.bf16.gmra.mxu0 %v863
      %v1963 = vpop.f32.mrf.mxu0
      %v1964 = vadd.f32 %v1024, %v1963
      %v1965 = vpop.f32.mrf.mxu0
      %v1966 = vadd.f32 %v1028, %v1965
      %v1967 = vpop.f32.mrf.mxu0
      %v1968 = vadd.f32 %v1024, %v1967
      %v1969 = vpop.f32.mrf.mxu0
      %v1970 = vadd.f32 %v1028, %v1969
      %1971 = vmatprep.mubr.bf16.mxu0 %v868
      %1972 = vmatmul.mubr.bf16.gmra.mxu0 %v867
      %v1973 = vpop.f32.mrf.mxu0
      %v1974 = vadd.f32 %v1024, %v1973
      %v1975 = vpop.f32.mrf.mxu0
      %v1976 = vadd.f32 %v1028, %v1975
      %v1977 = vpop.f32.mrf.mxu0
      %v1978 = vadd.f32 %v1024, %v1977
      %v1979 = vpop.f32.mrf.mxu0
      %v1980 = vadd.f32 %v1028, %v1979
      %1981 = vmatprep.mubr.bf16.mxu0 %v872
      %1982 = vmatmul.mubr.bf16.gmra.mxu0 %v871
      %v1983 = vpop.f32.mrf.mxu0
      %v1984 = vadd.f32 %v1024, %v1983
      %v1985 = vpop.f32.mrf.mxu0
      %v1986 = vadd.f32 %v1028, %v1985
      %v1987 = vpop.f32.mrf.mxu0
      %v1988 = vadd.f32 %v1024, %v1987
      %v1989 = vpop.f32.mrf.mxu0
      %v1990 = vadd.f32 %v1028, %v1989
      %1991 = vmatprep.mubr.bf16.mxu0 %v876
      %1992 = vmatmul.mubr.bf16.gmra.mxu0 %v875
      %v1993 = vpop.f32.mrf.mxu0
      %v1994 = vadd.f32 %v1024, %v1993
      %v1995 = vpop.f32.mrf.mxu0
      %v1996 = vadd.f32 %v1028, %v1995
      %v1997 = vpop.f32.mrf.mxu0
      %v1998 = vadd.f32 %v1024, %v1997
      %v1999 = vpop.f32.mrf.mxu0
      %v2000 = vadd.f32 %v1028, %v1999
      %2001 = vmatprep.mubr.bf16.mxu0 %v880
      %2002 = vmatmul.mubr.bf16.gmra.mxu0 %v879
      %v2003 = vpop.f32.mrf.mxu0
      %v2004 = vadd.f32 %v1024, %v2003
      %v2005 = vpop.f32.mrf.mxu0
      %v2006 = vadd.f32 %v1028, %v2005
      %v2007 = vpop.f32.mrf.mxu0
      %v2008 = vadd.f32 %v1024, %v2007
      %v2009 = vpop.f32.mrf.mxu0
      %v2010 = vadd.f32 %v1028, %v2009
      %2011 = vdwg.mxu0
      %2012 = vmatprep.subr.bf16.mxu0 %v1512
      %2013 = vmatpush1.bf16.msra.mxu0 %v1511
      %2014 = vmatprep.subr.bf16.mxu0 %v1508
      %2015 = vmatpush1.bf16.msra.mxu0 %v1507
      %2016 = vmatprep.subr.bf16.mxu0 %v1504
      %2017 = vmatpush1.bf16.msra.mxu0 %v1503
      %2018 = vmatprep.subr.bf16.mxu0 %v1500
      %2019 = vmatpush1.bf16.msra.mxu0 %v1499
      %2020 = vmatprep.subr.bf16.mxu0 %v1496
      %2021 = vmatpush1.bf16.msra.mxu0 %v1495
      %2022 = vmatprep.subr.bf16.mxu0 %v1492
      %2023 = vmatpush1.bf16.msra.mxu0 %v1491
      %2024 = vmatprep.subr.bf16.mxu0 %v1488
      %2025 = vmatpush1.bf16.msra.mxu0 %v1487
      %2026 = vmatprep.subr.bf16.mxu0 %v1484
      %2027 = vmatpush1.bf16.msra.mxu0 %v1483
      %2028 = vmatprep.subr.bf16.mxu0 %v1544
      %2029 = vmatpush2.bf16.msra.mxu0 %v1543
      %2030 = vmatprep.subr.bf16.mxu0 %v1540
      %2031 = vmatpush2.bf16.msra.mxu0 %v1539
      %2032 = vmatprep.subr.bf16.mxu0 %v1536
      %2033 = vmatpush2.bf16.msra.mxu0 %v1535
      %2034 = vmatprep.subr.bf16.mxu0 %v1532
      %2035 = vmatpush2.bf16.msra.mxu0 %v1531
      %2036 = vmatprep.subr.bf16.mxu0 %v1528
      %2037 = vmatpush2.bf16.msra.mxu0 %v1527
      %2038 = vmatprep.subr.bf16.mxu0 %v1524
      %2039 = vmatpush2.bf16.msra.mxu0 %v1523
      %2040 = vmatprep.subr.bf16.mxu0 %v1520
      %2041 = vmatpush2.bf16.msra.mxu0 %v1519
      %2042 = vmatprep.subr.bf16.mxu0 %v1516
      %2043 = vmatpush2.bf16.msra.mxu0 %v1515
      %2044 = vmatprep.mubr.bf16.mxu0 %v854
      %2045 = vmatmul.mubr.bf16.gmra.mxu0 %v853
      %v2046 = vpop.f32.mrf.mxu0
      %v2047 = vadd.f32 %v1934, %v2046
      %v2048 = vpop.f32.mrf.mxu0
      %v2049 = vadd.f32 %v1936, %v2048
      %v2050 = vpop.f32.mrf.mxu0
      %v2051 = vadd.f32 %v1938, %v2050
      %v2052 = vpop.f32.mrf.mxu0
      %v2053 = vadd.f32 %v1940, %v2052
      %2054 = vmatprep.mubr.bf16.mxu0 %v858
      %2055 = vmatmul.mubr.bf16.gmra.mxu0 %v857
      %v2056 = vpop.f32.mrf.mxu0
      %v2057 = vadd.f32 %v1944, %v2056
      %v2058 = vpop.f32.mrf.mxu0
      %v2059 = vadd.f32 %v1946, %v2058
      %v2060 = vpop.f32.mrf.mxu0
      %v2061 = vadd.f32 %v1948, %v2060
      %v2062 = vpop.f32.mrf.mxu0
      %v2063 = vadd.f32 %v1950, %v2062
      %2064 = vmatprep.mubr.bf16.mxu0 %v862
      %2065 = vmatmul.mubr.bf16.gmra.mxu0 %v861
      %v2066 = vpop.f32.mrf.mxu0
      %v2067 = vadd.f32 %v1954, %v2066
      %v2068 = vpop.f32.mrf.mxu0
      %v2069 = vadd.f32 %v1956, %v2068
      %v2070 = vpop.f32.mrf.mxu0
      %v2071 = vadd.f32 %v1958, %v2070
      %v2072 = vpop.f32.mrf.mxu0
      %v2073 = vadd.f32 %v1960, %v2072
      %2074 = vmatprep.mubr.bf16.mxu0 %v866
      %2075 = vmatmul.mubr.bf16.gmra.mxu0 %v865
      %v2076 = vpop.f32.mrf.mxu0
      %v2077 = vadd.f32 %v1964, %v2076
      %v2078 = vpop.f32.mrf.mxu0
      %v2079 = vadd.f32 %v1966, %v2078
      %v2080 = vpop.f32.mrf.mxu0
      %v2081 = vadd.f32 %v1968, %v2080
      %v2082 = vpop.f32.mrf.mxu0
      %v2083 = vadd.f32 %v1970, %v2082
      %2084 = vmatprep.mubr.bf16.mxu0 %v870
      %2085 = vmatmul.mubr.bf16.gmra.mxu0 %v869
      %v2086 = vpop.f32.mrf.mxu0
      %v2087 = vadd.f32 %v1974, %v2086
      %v2088 = vpop.f32.mrf.mxu0
      %v2089 = vadd.f32 %v1976, %v2088
      %v2090 = vpop.f32.mrf.mxu0
      %v2091 = vadd.f32 %v1978, %v2090
      %v2092 = vpop.f32.mrf.mxu0
      %v2093 = vadd.f32 %v1980, %v2092
      %2094 = vmatprep.mubr.bf16.mxu0 %v874
      %2095 = vmatmul.mubr.bf16.gmra.mxu0 %v873
      %v2096 = vpop.f32.mrf.mxu0
      %v2097 = vadd.f32 %v1984, %v2096
      %v2098 = vpop.f32.mrf.mxu0
      %v2099 = vadd.f32 %v1986, %v2098
      %v2100 = vpop.f32.mrf.mxu0
      %v2101 = vadd.f32 %v1988, %v2100
      %v2102 = vpop.f32.mrf.mxu0
      %v2103 = vadd.f32 %v1990, %v2102
      %2104 = vmatprep.mubr.bf16.mxu0 %v878
      %2105 = vmatmul.mubr.bf16.gmra.mxu0 %v877
      %v2106 = vpop.f32.mrf.mxu0
      %v2107 = vadd.f32 %v1994, %v2106
      %v2108 = vpop.f32.mrf.mxu0
      %v2109 = vadd.f32 %v1996, %v2108
      %v2110 = vpop.f32.mrf.mxu0
      %v2111 = vadd.f32 %v1998, %v2110
      %v2112 = vpop.f32.mrf.mxu0
      %v2113 = vadd.f32 %v2000, %v2112
      %2114 = vmatprep.mubr.bf16.mxu0 %v882
      %2115 = vmatmul.mubr.bf16.gmra.mxu0 %v881
      %v2116 = vpop.f32.mrf.mxu0
      %v2117 = vadd.f32 %v2004, %v2116
      %v2118 = vpop.f32.mrf.mxu0
      %v2119 = vadd.f32 %v2006, %v2118
      %v2120 = vpop.f32.mrf.mxu0
      %v2121 = vadd.f32 %v2008, %v2120
      %v2122 = vpop.f32.mrf.mxu0
      %v2123 = vadd.f32 %v2010, %v2122
      %2124 = vdwg.mxu0
      %v2125 = vmax.f32 %v1821, 0.0
      %v2126 = vmax.f32 %v1823, 0.0
      %v2127 = vmax.f32 %v2047, 0.0
      %v2128 = vmax.f32 %v2049, 0.0
      %v2129 = vmax.f32 %v1825, 0.0
      %v2130 = vmax.f32 %v1827, 0.0
      %v2131 = vmax.f32 %v2051, 0.0
      %v2132 = vmax.f32 %v2053, 0.0
      %v2133 = vmax.f32 %v1831, 0.0
      %v2134 = vmax.f32 %v1833, 0.0
      %v2135 = vmax.f32 %v2057, 0.0
      %v2136 = vmax.f32 %v2059, 0.0
      %v2137 = vmax.f32 %v1835, 0.0
      %v2138 = vmax.f32 %v1837, 0.0
      %v2139 = vmax.f32 %v2061, 0.0
      %v2140 = vmax.f32 %v2063, 0.0
      %v2141 = vmax.f32 %v1841, 0.0
      %v2142 = vmax.f32 %v1843, 0.0
      %v2143 = vmax.f32 %v2067, 0.0
      %v2144 = vmax.f32 %v2069, 0.0
      %v2145 = vmax.f32 %v1845, 0.0
      %v2146 = vmax.f32 %v1847, 0.0
      %v2147 = vmax.f32 %v2071, 0.0
      %v2148 = vmax.f32 %v2073, 0.0
      %v2149 = vmax.f32 %v1851, 0.0
      %v2150 = vmax.f32 %v1853, 0.0
      %v2151 = vmax.f32 %v2077, 0.0
      %v2152 = vmax.f32 %v2079, 0.0
      %v2153 = vmax.f32 %v1855, 0.0
      %v2154 = vmax.f32 %v1857, 0.0
      %v2155 = vmax.f32 %v2081, 0.0
      %v2156 = vmax.f32 %v2083, 0.0
      %v2157 = vmax.f32 %v1861, 0.0
      %v2158 = vmax.f32 %v1863, 0.0
      %v2159 = vmax.f32 %v2087, 0.0
      %v2160 = vmax.f32 %v2089, 0.0
      %v2161 = vmax.f32 %v1865, 0.0
      %v2162 = vmax.f32 %v1867, 0.0
      %v2163 = vmax.f32 %v2091, 0.0
      %v2164 = vmax.f32 %v2093, 0.0
      %v2165 = vmax.f32 %v1871, 0.0
      %v2166 = vmax.f32 %v1873, 0.0
      %v2167 = vmax.f32 %v2097, 0.0
      %v2168 = vmax.f32 %v2099, 0.0
      %v2169 = vmax.f32 %v1875, 0.0
      %v2170 = vmax.f32 %v1877, 0.0
      %v2171 = vmax.f32 %v2101, 0.0
      %v2172 = vmax.f32 %v2103, 0.0
      %v2173 = vmax.f32 %v1881, 0.0
      %v2174 = vmax.f32 %v1883, 0.0
      %v2175 = vmax.f32 %v2107, 0.0
      %v2176 = vmax.f32 %v2109, 0.0
      %v2177 = vmax.f32 %v1885, 0.0
      %v2178 = vmax.f32 %v1887, 0.0
      %v2179 = vmax.f32 %v2111, 0.0
      %v2180 = vmax.f32 %v2113, 0.0
      %v2181 = vmax.f32 %v1891, 0.0
      %v2182 = vmax.f32 %v1893, 0.0
      %v2183 = vmax.f32 %v2117, 0.0
      %v2184 = vmax.f32 %v2119, 0.0
      %v2185 = vmax.f32 %v1895, 0.0
      %v2186 = vmax.f32 %v1897, 0.0
      %v2187 = vmax.f32 %v2121, 0.0
      %v2188 = vmax.f32 %v2123, 0.0
      %v2189 = vpack.c.bf16 %v2129, %v2125
      %v2190 = vpack.c.bf16 %v2130, %v2126
      %v2191 = vpack.c.bf16 %v2131, %v2127
      %v2192 = vpack.c.bf16 %v2132, %v2128
      %v2193 = vpack.c.bf16 %v2137, %v2133
      %v2194 = vpack.c.bf16 %v2138, %v2134
      %v2195 = vpack.c.bf16 %v2139, %v2135
      %v2196 = vpack.c.bf16 %v2140, %v2136
      %v2197 = vpack.c.bf16 %v2145, %v2141
      %v2198 = vpack.c.bf16 %v2146, %v2142
      %v2199 = vpack.c.bf16 %v2147, %v2143
      %v2200 = vpack.c.bf16 %v2148, %v2144
      %v2201 = vpack.c.bf16 %v2153, %v2149
      %v2202 = vpack.c.bf16 %v2154, %v2150
      %v2203 = vpack.c.bf16 %v2155, %v2151
      %v2204 = vpack.c.bf16 %v2156, %v2152
      %v2205 = vpack.c.bf16 %v2161, %v2157
      %v2206 = vpack.c.bf16 %v2162, %v2158
      %v2207 = vpack.c.bf16 %v2163, %v2159
      %v2208 = vpack.c.bf16 %v2164, %v2160
      %v2209 = vpack.c.bf16 %v2169, %v2165
      %v2210 = vpack.c.bf16 %v2170, %v2166
      %v2211 = vpack.c.bf16 %v2171, %v2167
      %v2212 = vpack.c.bf16 %v2172, %v2168
      %v2213 = vpack.c.bf16 %v2177, %v2173
      %v2214 = vpack.c.bf16 %v2178, %v2174
      %v2215 = vpack.c.bf16 %v2179, %v2175
      %v2216 = vpack.c.bf16 %v2180, %v2176
      %v2217 = vpack.c.bf16 %v2185, %v2181
      %v2218 = vpack.c.bf16 %v2186, %v2182
      %v2219 = vpack.c.bf16 %v2187, %v2183
      %v2220 = vpack.c.bf16 %v2188, %v2184
      %v2221 = vld [vmem:[%s5] sm:$0xf]
      %v2222 = vld [vmem:[%s5 + $0x4] sm:$0xf]
      %v2223 = vld [vmem:[%s5 + $0x8] sm:$0xf]
      %v2224 = vld [vmem:[%s5 + $0xc] sm:$0xf]
      %v2225 = vld [vmem:[%s5 + $0x10] sm:$0xf]
      %v2226 = vld [vmem:[%s5 + $0x14] sm:$0xf]
      %v2227 = vld [vmem:[%s5 + $0x18] sm:$0xf]
      %v2228 = vld [vmem:[%s5 + $0x1c] sm:$0xf]
      %v2229 = vld [vmem:[%s5 + $0x20] sm:$0xf]
      %v2230 = vld [vmem:[%s5 + $0x24] sm:$0xf]
      %v2231 = vld [vmem:[%s5 + $0x28] sm:$0xf]
      %v2232 = vld [vmem:[%s5 + $0x2c] sm:$0xf]
      %v2233 = vld [vmem:[%s5 + $0x30] sm:$0xf]
      %v2234 = vld [vmem:[%s5 + $0x34] sm:$0xf]
      %v2235 = vld [vmem:[%s5 + $0x38] sm:$0xf]
      %v2236 = vld [vmem:[%s5 + $0x3c] sm:$0xf]
      %v2237 = vld [vmem:[%s5 + $0x40] sm:$0xf]
      %v2238 = vld [vmem:[%s5 + $0x44] sm:$0xf]
      %v2239 = vld [vmem:[%s5 + $0x48] sm:$0xf]
      %v2240 = vld [vmem:[%s5 + $0x4c] sm:$0xf]
      %v2241 = vld [vmem:[%s5 + $0x50] sm:$0xf]
      %v2242 = vld [vmem:[%s5 + $0x54] sm:$0xf]
      %v2243 = vld [vmem:[%s5 + $0x58] sm:$0xf]
      %v2244 = vld [vmem:[%s5 + $0x5c] sm:$0xf]
      %v2245 = vld [vmem:[%s5 + $0x60] sm:$0xf]
      %v2246 = vld [vmem:[%s5 + $0x64] sm:$0xf]
      %v2247 = vld [vmem:[%s5 + $0x68] sm:$0xf]
      %v2248 = vld [vmem:[%s5 + $0x6c] sm:$0xf]
      %v2249 = vld [vmem:[%s5 + $0x70] sm:$0xf]
      %v2250 = vld [vmem:[%s5 + $0x74] sm:$0xf]
      %v2251 = vld [vmem:[%s5 + $0x78] sm:$0xf]
      %v2252 = vld [vmem:[%s5 + $0x7c] sm:$0xf]
      %v2253 = vld [vmem:[%s5 + $0x80] sm:$0xf]
      %v2254 = vld [vmem:[%s5 + $0x84] sm:$0xf]
      %v2255 = vld [vmem:[%s5 + $0x88] sm:$0xf]
      %v2256 = vld [vmem:[%s5 + $0x8c] sm:$0xf]
      %v2257 = vld [vmem:[%s5 + $0x90] sm:$0xf]
      %v2258 = vld [vmem:[%s5 + $0x94] sm:$0xf]
      %v2259 = vld [vmem:[%s5 + $0x98] sm:$0xf]
      %v2260 = vld [vmem:[%s5 + $0x9c] sm:$0xf]
      %v2261 = vld [vmem:[%s5 + $0xa0] sm:$0xf]
      %v2262 = vld [vmem:[%s5 + $0xa4] sm:$0xf]
      %v2263 = vld [vmem:[%s5 + $0xa8] sm:$0xf]
      %v2264 = vld [vmem:[%s5 + $0xac] sm:$0xf]
      %v2265 = vld [vmem:[%s5 + $0xb0] sm:$0xf]
      %v2266 = vld [vmem:[%s5 + $0xb4] sm:$0xf]
      %v2267 = vld [vmem:[%s5 + $0xb8] sm:$0xf]
      %v2268 = vld [vmem:[%s5 + $0xbc] sm:$0xf]
      %v2269 = vld [vmem:[%s5 + $0xc0] sm:$0xf]
      %v2270 = vld [vmem:[%s5 + $0xc4] sm:$0xf]
      %v2271 = vld [vmem:[%s5 + $0xc8] sm:$0xf]
      %v2272 = vld [vmem:[%s5 + $0xcc] sm:$0xf]
      %v2273 = vld [vmem:[%s5 + $0xd0] sm:$0xf]
      %v2274 = vld [vmem:[%s5 + $0xd4] sm:$0xf]
      %v2275 = vld [vmem:[%s5 + $0xd8] sm:$0xf]
      %v2276 = vld [vmem:[%s5 + $0xdc] sm:$0xf]
      %v2277 = vld [vmem:[%s5 + $0xe0] sm:$0xf]
      %v2278 = vld [vmem:[%s5 + $0xe4] sm:$0xf]
      %v2279 = vld [vmem:[%s5 + $0xe8] sm:$0xf]
      %v2280 = vld [vmem:[%s5 + $0xec] sm:$0xf]
      %v2281 = vld [vmem:[%s5 + $0xf0] sm:$0xf]
      %v2282 = vld [vmem:[%s5 + $0xf4] sm:$0xf]
      %v2283 = vld [vmem:[%s5 + $0xf8] sm:$0xf]
      %v2284 = vld [vmem:[%s5 + $0xfc] sm:$0xf]
      %v2285 = vld [vmem:[%s6] sm:$0x1]
      %v2287 = vlaneseq
      %v2288 = vshrl.u32 %v2287, 7
      %v2289 = vsub.s32 0, %v2288
      %v2290 = vrot.slane %v2285, %v2289
      %v2356 = vunpack.c.l.b16 %v2221
      %v2357 = vunpack.c.l.b16 %v2222
      %v2358 = vunpack.c.l.b16 %v2223
      %v2359 = vunpack.c.l.b16 %v2224
      %v2360 = vunpack.c.l.b16 %v2225
      %v2361 = vunpack.c.l.b16 %v2226
      %v2362 = vunpack.c.l.b16 %v2227
      %v2363 = vunpack.c.l.b16 %v2228
      %v2364 = vunpack.c.l.b16 %v2229
      %v2365 = vunpack.c.l.b16 %v2230
      %v2366 = vunpack.c.l.b16 %v2231
      %v2367 = vunpack.c.l.b16 %v2232
      %v2368 = vunpack.c.l.b16 %v2233
      %v2369 = vunpack.c.l.b16 %v2234
      %v2370 = vunpack.c.l.b16 %v2235
      %v2371 = vunpack.c.l.b16 %v2236
      %v2372 = vunpack.c.l.b16 %v2237
      %v2373 = vunpack.c.l.b16 %v2238
      %v2374 = vunpack.c.l.b16 %v2239
      %v2375 = vunpack.c.l.b16 %v2240
      %v2376 = vunpack.c.l.b16 %v2241
      %v2377 = vunpack.c.l.b16 %v2242
      %v2378 = vunpack.c.l.b16 %v2243
      %v2379 = vunpack.c.l.b16 %v2244
      %v2380 = vunpack.c.l.b16 %v2245
      %v2381 = vunpack.c.l.b16 %v2246
      %v2382 = vunpack.c.l.b16 %v2247
      %v2383 = vunpack.c.l.b16 %v2248
      %v2384 = vunpack.c.l.b16 %v2249
      %v2385 = vunpack.c.l.b16 %v2250
      %v2386 = vunpack.c.l.b16 %v2251
      %v2387 = vunpack.c.l.b16 %v2252
      %v2388 = vunpack.c.l.b16 %v2253
      %v2389 = vunpack.c.l.b16 %v2254
      %v2390 = vunpack.c.l.b16 %v2255
      %v2391 = vunpack.c.l.b16 %v2256
      %v2392 = vunpack.c.l.b16 %v2257
      %v2393 = vunpack.c.l.b16 %v2258
      %v2394 = vunpack.c.l.b16 %v2259
      %v2395 = vunpack.c.l.b16 %v2260
      %v2396 = vunpack.c.l.b16 %v2261
      %v2397 = vunpack.c.l.b16 %v2262
      %v2398 = vunpack.c.l.b16 %v2263
      %v2399 = vunpack.c.l.b16 %v2264
      %v2400 = vunpack.c.l.b16 %v2265
      %v2401 = vunpack.c.l.b16 %v2266
      %v2402 = vunpack.c.l.b16 %v2267
      %v2403 = vunpack.c.l.b16 %v2268
      %v2404 = vunpack.c.l.b16 %v2269
      %v2405 = vunpack.c.l.b16 %v2270
      %v2406 = vunpack.c.l.b16 %v2271
      %v2407 = vunpack.c.l.b16 %v2272
      %v2408 = vunpack.c.l.b16 %v2273
      %v2409 = vunpack.c.l.b16 %v2274
      %v2410 = vunpack.c.l.b16 %v2275
      %v2411 = vunpack.c.l.b16 %v2276
      %v2412 = vunpack.c.l.b16 %v2277
      %v2413 = vunpack.c.l.b16 %v2278
      %v2414 = vunpack.c.l.b16 %v2279
      %v2415 = vunpack.c.l.b16 %v2280
      %v2416 = vunpack.c.l.b16 %v2281
      %v2417 = vunpack.c.l.b16 %v2282
      %v2418 = vunpack.c.l.b16 %v2283
      %v2419 = vunpack.c.l.b16 %v2284
      %v2420 = vpack.c.b16 %v2357, %v2356
      %v2421 = vpack.c.b16 %v2359, %v2358
      %v2422 = vpack.c.b16 %v2361, %v2360
      %v2423 = vpack.c.b16 %v2363, %v2362
      %v2424 = vpack.c.b16 %v2365, %v2364
      %v2425 = vpack.c.b16 %v2367, %v2366
      %v2426 = vpack.c.b16 %v2369, %v2368
      %v2427 = vpack.c.b16 %v2371, %v2370
      %v2428 = vpack.c.b16 %v2373, %v2372
      %v2429 = vpack.c.b16 %v2375, %v2374
      %v2430 = vpack.c.b16 %v2377, %v2376
      %v2431 = vpack.c.b16 %v2379, %v2378
      %v2432 = vpack.c.b16 %v2381, %v2380
      %v2433 = vpack.c.b16 %v2383, %v2382
      %v2434 = vpack.c.b16 %v2385, %v2384
      %v2435 = vpack.c.b16 %v2387, %v2386
      %v2436 = vpack.c.b16 %v2389, %v2388
      %v2437 = vpack.c.b16 %v2391, %v2390
      %v2438 = vpack.c.b16 %v2393, %v2392
      %v2439 = vpack.c.b16 %v2395, %v2394
      %v2440 = vpack.c.b16 %v2397, %v2396
      %v2441 = vpack.c.b16 %v2399, %v2398
      %v2442 = vpack.c.b16 %v2401, %v2400
      %v2443 = vpack.c.b16 %v2403, %v2402
      %v2444 = vpack.c.b16 %v2405, %v2404
      %v2445 = vpack.c.b16 %v2407, %v2406
      %v2446 = vpack.c.b16 %v2409, %v2408
      %v2447 = vpack.c.b16 %v2411, %v2410
      %v2448 = vpack.c.b16 %v2413, %v2412
      %v2449 = vpack.c.b16 %v2415, %v2414
      %v2450 = vpack.c.b16 %v2417, %v2416
      %v2451 = vpack.c.b16 %v2419, %v2418
      %2484 = vmatprep.subr.bf16.mxu0 0
      %2485 = vmatpush1.bf16.msra.mxu0 %v2427
      %2486 = vmatprep.subr.bf16.mxu0 0
      %2487 = vmatpush1.bf16.msra.mxu0 %v2426
      %2488 = vmatprep.subr.bf16.mxu0 0
      %2489 = vmatpush1.bf16.msra.mxu0 %v2425
      %2490 = vmatprep.subr.bf16.mxu0 0
      %2491 = vmatpush1.bf16.msra.mxu0 %v2424
      %2492 = vmatprep.subr.bf16.mxu0 0
      %2493 = vmatpush1.bf16.msra.mxu0 %v2423
      %2494 = vmatprep.subr.bf16.mxu0 0
      %2495 = vmatpush1.bf16.msra.mxu0 %v2422
      %2496 = vmatprep.subr.bf16.mxu0 0
      %2497 = vmatpush1.bf16.msra.mxu0 %v2421
      %2498 = vmatprep.subr.bf16.mxu0 0
      %2499 = vmatpush1.bf16.msra.mxu0 %v2420
      %2500 = vmatprep.subr.bf16.mxu0 0
      %2501 = vmatpush2.bf16.msra.mxu0 %v2435
      %2502 = vmatprep.subr.bf16.mxu0 0
      %2503 = vmatpush2.bf16.msra.mxu0 %v2434
      %2504 = vmatprep.subr.bf16.mxu0 0
      %2505 = vmatpush2.bf16.msra.mxu0 %v2433
      %2506 = vmatprep.subr.bf16.mxu0 0
      %2507 = vmatpush2.bf16.msra.mxu0 %v2432
      %2508 = vmatprep.subr.bf16.mxu0 0
      %2509 = vmatpush2.bf16.msra.mxu0 %v2431
      %2510 = vmatprep.subr.bf16.mxu0 0
      %2511 = vmatpush2.bf16.msra.mxu0 %v2430
      %2512 = vmatprep.subr.bf16.mxu0 0
      %2513 = vmatpush2.bf16.msra.mxu0 %v2429
      %2514 = vmatprep.subr.bf16.mxu0 0
      %2515 = vmatpush2.bf16.msra.mxu0 %v2428
      %2516 = vmatprep.mubr.bf16.mxu0 %v2190
      %2517 = vmatmul.mubr.bf16.gmra.mxu0 %v2189
      %v2518 = vpop.f32.mrf.mxu0
      %v2519 = vadd.f32 %v2290, %v2518
      %v2520 = vpop.f32.mrf.mxu0
      %v2521 = vpop.f32.mrf.mxu0
      %v2522 = vadd.f32 %v2290, %v2521
      %v2523 = vpop.f32.mrf.mxu0
      %2524 = vmatprep.mubr.bf16.mxu0 %v2194
      %2525 = vmatmul.mubr.bf16.gmra.mxu0 %v2193
      %v2526 = vpop.f32.mrf.mxu0
      %v2527 = vadd.f32 %v2290, %v2526
      %v2528 = vpop.f32.mrf.mxu0
      %v2529 = vpop.f32.mrf.mxu0
      %v2530 = vadd.f32 %v2290, %v2529
      %v2531 = vpop.f32.mrf.mxu0
      %2532 = vmatprep.mubr.bf16.mxu0 %v2198
      %2533 = vmatmul.mubr.bf16.gmra.mxu0 %v2197
      %v2534 = vpop.f32.mrf.mxu0
      %v2535 = vadd.f32 %v2290, %v2534
      %v2536 = vpop.f32.mrf.mxu0
      %v2537 = vpop.f32.mrf.mxu0
      %v2538 = vadd.f32 %v2290, %v2537
      %v2539 = vpop.f32.mrf.mxu0
      %2540 = vmatprep.mubr.bf16.mxu0 %v2202
      %2541 = vmatmul.mubr.bf16.gmra.mxu0 %v2201
      %v2542 = vpop.f32.mrf.mxu0
      %v2543 = vadd.f32 %v2290, %v2542
      %v2544 = vpop.f32.mrf.mxu0
      %v2545 = vpop.f32.mrf.mxu0
      %v2546 = vadd.f32 %v2290, %v2545
      %v2547 = vpop.f32.mrf.mxu0
      %2548 = vmatprep.mubr.bf16.mxu0 %v2206
      %2549 = vmatmul.mubr.bf16.gmra.mxu0 %v2205
      %v2550 = vpop.f32.mrf.mxu0
      %v2551 = vadd.f32 %v2290, %v2550
      %v2552 = vpop.f32.mrf.mxu0
      %v2553 = vpop.f32.mrf.mxu0
      %v2554 = vadd.f32 %v2290, %v2553
      %v2555 = vpop.f32.mrf.mxu0
      %2556 = vmatprep.mubr.bf16.mxu0 %v2210
      %2557 = vmatmul.mubr.bf16.gmra.mxu0 %v2209
      %v2558 = vpop.f32.mrf.mxu0
      %v2559 = vadd.f32 %v2290, %v2558
      %v2560 = vpop.f32.mrf.mxu0
      %v2561 = vpop.f32.mrf.mxu0
      %v2562 = vadd.f32 %v2290, %v2561
      %v2563 = vpop.f32.mrf.mxu0
      %2564 = vmatprep.mubr.bf16.mxu0 %v2214
      %2565 = vmatmul.mubr.bf16.gmra.mxu0 %v2213
      %v2566 = vpop.f32.mrf.mxu0
      %v2567 = vadd.f32 %v2290, %v2566
      %v2568 = vpop.f32.mrf.mxu0
      %v2569 = vpop.f32.mrf.mxu0
      %v2570 = vadd.f32 %v2290, %v2569
      %v2571 = vpop.f32.mrf.mxu0
      %2572 = vmatprep.mubr.bf16.mxu0 %v2218
      %2573 = vmatmul.mubr.bf16.gmra.mxu0 %v2217
      %v2574 = vpop.f32.mrf.mxu0
      %v2575 = vadd.f32 %v2290, %v2574
      %v2576 = vpop.f32.mrf.mxu0
      %v2577 = vpop.f32.mrf.mxu0
      %v2578 = vadd.f32 %v2290, %v2577
      %v2579 = vpop.f32.mrf.mxu0
      %2580 = vdwg.mxu0
      %2581 = vmatprep.subr.bf16.mxu0 0
      %2582 = vmatpush1.bf16.msra.mxu0 %v2443
      %2583 = vmatprep.subr.bf16.mxu0 0
      %2584 = vmatpush1.bf16.msra.mxu0 %v2442
      %2585 = vmatprep.subr.bf16.mxu0 0
      %2586 = vmatpush1.bf16.msra.mxu0 %v2441
      %2587 = vmatprep.subr.bf16.mxu0 0
      %2588 = vmatpush1.bf16.msra.mxu0 %v2440
      %2589 = vmatprep.subr.bf16.mxu0 0
      %2590 = vmatpush1.bf16.msra.mxu0 %v2439
      %2591 = vmatprep.subr.bf16.mxu0 0
      %2592 = vmatpush1.bf16.msra.mxu0 %v2438
      %2593 = vmatprep.subr.bf16.mxu0 0
      %2594 = vmatpush1.bf16.msra.mxu0 %v2437
      %2595 = vmatprep.subr.bf16.mxu0 0
      %2596 = vmatpush1.bf16.msra.mxu0 %v2436
      %2597 = vmatprep.subr.bf16.mxu0 0
      %2598 = vmatpush2.bf16.msra.mxu0 %v2451
      %2599 = vmatprep.subr.bf16.mxu0 0
      %2600 = vmatpush2.bf16.msra.mxu0 %v2450
      %2601 = vmatprep.subr.bf16.mxu0 0
      %2602 = vmatpush2.bf16.msra.mxu0 %v2449
      %2603 = vmatprep.subr.bf16.mxu0 0
      %2604 = vmatpush2.bf16.msra.mxu0 %v2448
      %2605 = vmatprep.subr.bf16.mxu0 0
      %2606 = vmatpush2.bf16.msra.mxu0 %v2447
      %2607 = vmatprep.subr.bf16.mxu0 0
      %2608 = vmatpush2.bf16.msra.mxu0 %v2446
      %2609 = vmatprep.subr.bf16.mxu0 0
      %2610 = vmatpush2.bf16.msra.mxu0 %v2445
      %2611 = vmatprep.subr.bf16.mxu0 0
      %2612 = vmatpush2.bf16.msra.mxu0 %v2444
      %2613 = vmatprep.mubr.bf16.mxu0 %v2192
      %2614 = vmatmul.mubr.bf16.gmra.mxu0 %v2191
      %v2615 = vpop.f32.mrf.mxu0
      %v2616 = vadd.f32 %v2519, %v2615
      %v2617 = vpop.f32.mrf.mxu0
      %v2618 = vpop.f32.mrf.mxu0
      %v2619 = vadd.f32 %v2522, %v2618
      %v2620 = vpop.f32.mrf.mxu0
      %2621 = vmatprep.mubr.bf16.mxu0 %v2196
      %2622 = vmatmul.mubr.bf16.gmra.mxu0 %v2195
      %v2623 = vpop.f32.mrf.mxu0
      %v2624 = vadd.f32 %v2527, %v2623
      %v2625 = vpop.f32.mrf.mxu0
      %v2626 = vpop.f32.mrf.mxu0
      %v2627 = vadd.f32 %v2530, %v2626
      %v2628 = vpop.f32.mrf.mxu0
      %2629 = vmatprep.mubr.bf16.mxu0 %v2200
      %2630 = vmatmul.mubr.bf16.gmra.mxu0 %v2199
      %v2631 = vpop.f32.mrf.mxu0
      %v2632 = vadd.f32 %v2535, %v2631
      %v2633 = vpop.f32.mrf.mxu0
      %v2634 = vpop.f32.mrf.mxu0
      %v2635 = vadd.f32 %v2538, %v2634
      %v2636 = vpop.f32.mrf.mxu0
      %2637 = vmatprep.mubr.bf16.mxu0 %v2204
      %2638 = vmatmul.mubr.bf16.gmra.mxu0 %v2203
      %v2639 = vpop.f32.mrf.mxu0
      %v2640 = vadd.f32 %v2543, %v2639
      %v2641 = vpop.f32.mrf.mxu0
      %v2642 = vpop.f32.mrf.mxu0
      %v2643 = vadd.f32 %v2546, %v2642
      %v2644 = vpop.f32.mrf.mxu0
      %2645 = vmatprep.mubr.bf16.mxu0 %v2208
      %2646 = vmatmul.mubr.bf16.gmra.mxu0 %v2207
      %v2647 = vpop.f32.mrf.mxu0
      %v2648 = vadd.f32 %v2551, %v2647
      %v2649 = vpop.f32.mrf.mxu0
      %v2650 = vpop.f32.mrf.mxu0
      %v2651 = vadd.f32 %v2554, %v2650
      %v2652 = vpop.f32.mrf.mxu0
      %2653 = vmatprep.mubr.bf16.mxu0 %v2212
      %2654 = vmatmul.mubr.bf16.gmra.mxu0 %v2211
      %v2655 = vpop.f32.mrf.mxu0
      %v2656 = vadd.f32 %v2559, %v2655
      %v2657 = vpop.f32.mrf.mxu0
      %v2658 = vpop.f32.mrf.mxu0
      %v2659 = vadd.f32 %v2562, %v2658
      %v2660 = vpop.f32.mrf.mxu0
      %2661 = vmatprep.mubr.bf16.mxu0 %v2216
      %2662 = vmatmul.mubr.bf16.gmra.mxu0 %v2215
      %v2663 = vpop.f32.mrf.mxu0
      %v2664 = vadd.f32 %v2567, %v2663
      %v2665 = vpop.f32.mrf.mxu0
      %v2666 = vpop.f32.mrf.mxu0
      %v2667 = vadd.f32 %v2570, %v2666
      %v2668 = vpop.f32.mrf.mxu0
      %2669 = vmatprep.mubr.bf16.mxu0 %v2220
      %2670 = vmatmul.mubr.bf16.gmra.mxu0 %v2219
      %v2671 = vpop.f32.mrf.mxu0
      %v2672 = vadd.f32 %v2575, %v2671
      %v2673 = vpop.f32.mrf.mxu0
      %v2674 = vpop.f32.mrf.mxu0
      %v2675 = vadd.f32 %v2578, %v2674
      %v2676 = vpop.f32.mrf.mxu0
      %2677 = vdwg.mxu0
      %2678 = vst [vmem:[%s280] sm:$0xff] %v2616
      %2679 = vst [vmem:[%s280 + $0x8] sm:$0xff] %v2619
      %2680 = vst [vmem:[%s280 + $0x10] sm:$0xff] %v2624
      %2681 = vst [vmem:[%s280 + $0x18] sm:$0xff] %v2627
      %2682 = vst [vmem:[%s280 + $0x20] sm:$0xff] %v2632
      %2683 = vst [vmem:[%s280 + $0x28] sm:$0xff] %v2635
      %2684 = vst [vmem:[%s280 + $0x30] sm:$0xff] %v2640
      %2685 = vst [vmem:[%s280 + $0x38] sm:$0xff] %v2643
      %2686 = vst [vmem:[%s280 + $0x40] sm:$0xff] %v2648
      %2687 = vst [vmem:[%s280 + $0x48] sm:$0xff] %v2651
      %2688 = vst [vmem:[%s280 + $0x50] sm:$0xff] %v2656
      %2689 = vst [vmem:[%s280 + $0x58] sm:$0xff] %v2659
      %2690 = vst [vmem:[%s280 + $0x60] sm:$0xff] %v2664
      %2691 = vst [vmem:[%s280 + $0x68] sm:$0xff] %v2667
      %2692 = vst [vmem:[%s280 + $0x70] sm:$0xff] %v2672
      %2693 = vst [vmem:[%s280 + $0x78] sm:$0xff] %v2675
      %s2694 = smul.u32 16, %s18
      %p2695 = scmp.lt.s32.totalorder %s2694, 31
      %s2696 = scalar_select %p2695, %s2694, 31
      %s2697 = smul.addr %s2696, 8
      %s2698 = scalar_lea.vmem %s7, %s2697
      // Predicated region
      $region49: #{gnn_wrapper_explain_forward.1} parent=47 // pred_check
        %p2699 = pneg %p188
      $region50: #{gnn_wrapper_explain_forward.1} parent=47 // pred_check_branch
        %2701 = sbr.rel (%p2699) target = $region52
      $region51: #{gnn_wrapper_explain_forward.1} parent=47 // pred_region
        %s2702 = smul.u32 16, %s18
      $region52: #{gnn_wrapper_explain_forward.1} parent=47 // pred_fallthru
        _
    $region48: #{gnn_wrapper_explain_forward.1} parent=5 // pred_fallthru
      _
    %p2703 = scmp.le.s32.totalorder 2, %s13
    // Predicated region
    $region53: #{gnn_wrapper_explain_forward.1} parent=5 // pred_check
      %p2704 = pneg %p2703
    $region54: #{gnn_wrapper_explain_forward.1} parent=5 // pred_check_branch
      %2706 = sbr.rel (%p2704) target = $region56
    $region55: #{gnn_wrapper_explain_forward.1} parent=5 // pred_region
      %s2707 = ssub.s32 %s13, 2
      // Predicated region
      $region57: #{gnn_wrapper_explain_forward.1} parent=55 // pred_check
        %p2708 = pneg %p194
      $region58: #{gnn_wrapper_explain_forward.1} parent=55 // pred_check_branch
        %2710 = sbr.rel (%p2708) target = $region60
      $region59: #{gnn_wrapper_explain_forward.1} parent=55 // pred_region
        %s2711 = smul.u32 16, %s19
        %p2712 = scmp.lt.s32.totalorder %s2711, 31
        %s2713 = scalar_select %p2712, %s2711, 31
        %s2714 = smul.addr %s2713, 8
        %s2715 = scalar_lea.vmem %s7, %s2714
      $region60: #{gnn_wrapper_explain_forward.1} parent=55 // pred_fallthru
        _
    $region56: #{gnn_wrapper_explain_forward.1} parent=5 // pred_fallthru
      _
  $region6: #{gnn_wrapper_explain_forward.1} parent=0 // loop_footer
    %s17 = sadd.s32 1, %s13
  $region7: #{gnn_wrapper_explain_forward.1} parent=0 // loop_footer_branch
    %12 = sbr.rel target = $region3
  $region8: #{gnn_wrapper_explain_forward.1} parent=0 // loop_exit
    _

</llo_original>
